<compile_context>
chip_gen: v5e
topology: v5e:2x2
jax: 0.10.0
libtpu: 0.0.40
codegen_flags: <defaults>
</compile_context>

<pallas_src>
import jax
import jax.numpy as jnp
from jax.experimental import pallas as pl
from jax.experimental.pallas import tpu as pltpu

# Stand-ins for os.environ['MOBILE_ROBOT_HL_MAX_{LINEAR,ANGULAR}_VEL']
MAX_LINEAR_VELOCITY = 1.0
MAX_ANGULAR_VELOCITY = 1.0

# TODO(synk): base/out architecture is config-driven via exec() in the original module;
#             a fixed representative instance is used here.
_IN_C, _IN_H, _IN_W = 4, 16, 16
_C1, _H1, _W1 = 8, 8, 8
_C2, _H2, _W2 = 16, 4, 4
_FLAT = _C2 * _H2 * _W2       # 256
_HID = 32
_OUT = 3


# --------------------------------------------------------------------------------------
# Fused kernel: conv1+ReLU, conv2+ReLU, flatten, fc1+ReLU, fc2, OutputProcessor.
# --------------------------------------------------------------------------------------
def _backbone(x_ref, w1_ref, b1_ref, w2_ref, b2_ref, w3_ref, b3_ref, w4_ref, b4_ref):
    # 4 chained MXU matmuls; bf16 operands, f32 accumulate; activations stay in VMEM/vregs.
    h = x_ref[...].astype(jnp.bfloat16)
    h = jnp.dot(h, w1_ref[...], preferred_element_type=jnp.float32) + b1_ref[...]    # conv1
    h = jnp.maximum(h, 0.0).astype(jnp.bfloat16)
    h = jnp.dot(h, w2_ref[...], preferred_element_type=jnp.float32) + b2_ref[...]    # conv2
    h = jnp.maximum(h, 0.0).astype(jnp.bfloat16)
    h = jnp.dot(h, w3_ref[...], preferred_element_type=jnp.float32) + b3_ref[...]    # fc1
    h = jnp.maximum(h, 0.0).astype(jnp.bfloat16)
    return jnp.dot(h, w4_ref[...], preferred_element_type=jnp.float32) + b4_ref[...]  # fc2


def _mult_adder(shape):
    # OutputProcessor constants baked in-kernel (no extra input streams); built from
    # iota + selects so only scalar (splat) constants are materialized.
    lane = jax.lax.broadcasted_iota(jnp.int32, shape, 1)
    mult = jnp.where(lane == 0, MAX_LINEAR_VELOCITY,
                     jnp.where(lane == 1, MAX_ANGULAR_VELOCITY, 0.5)).astype(jnp.float32)
    add = jnp.where(lane == 2, 0.5, 0.0).astype(jnp.float32)
    return mult, add


def _fused_kernel(x_ref, w1_ref, b1_ref, w2_ref, b2_ref, w3_ref, b3_ref, w4_ref, b4_ref,
                  o_ref):
    y = _backbone(x_ref, w1_ref, b1_ref, w2_ref, b2_ref, w3_ref, b3_ref, w4_ref, b4_ref)
    mult, add = _mult_adder(y.shape)
    o_ref[...] = jnp.tanh(y) * mult + add


def _fused_kernel_noise(x_ref, w1_ref, b1_ref, w2_ref, b2_ref, w3_ref, b3_ref, w4_ref,
                        b4_ref, noise_t_ref, noise_ref, o_ref):
    y = _backbone(x_ref, w1_ref, b1_ref, w2_ref, b2_ref, w3_ref, b3_ref, w4_ref, b4_ref)
    mult, add = _mult_adder(y.shape)
    scaled = jnp.tanh(y) * mult
    nz = noise_ref[0, 0]                       # noise scalar read from SMEM
    o_ref[...] = nz * noise_t_ref[...] + (1.0 - nz) * scaled + add


def _pick_tm(m):
    # One block for small batches (single grid step); multiple 'parallel' blocks for
    # big / folded-5D batches so v7x's two TensorCores can split the rows.
    if m <= 256:
        return m
    for tm in (256, 128):
        if m % tm == 0:
            return tm
    return m


@jax.jit
def _fused_forward(x2d, w1, b1, w2, b2, w3, b3, w4, b4, noise_tensor=None, noise=None):
    m, k = x2d.shape
    tm = _pick_tm(m)
    grid = (m // tm,)

    def rows(n):
        return pl.BlockSpec((tm, n), lambda i: (i, 0))

    def whole(a):
        return pl.BlockSpec(a.shape, lambda i: (0, 0))

    in_specs = [rows(k), whole(w1), whole(b1), whole(w2), whole(b2),
                whole(w3), whole(b3), whole(w4), whole(b4)]
    args = [x2d, w1, b1, w2, b2, w3, b3, w4, b4]

    if noise_tensor is None:
        kernel = _fused_kernel
    else:
        kernel = _fused_kernel_noise
        in_specs += [rows(_OUT), pl.BlockSpec(memory_space=pltpu.MemorySpace.SMEM)]
        args += [noise_tensor, jnp.asarray(noise, jnp.float32).reshape(1, 1)]

    return pl.pallas_call(
        kernel,
        out_shape=jax.ShapeDtypeStruct((m, _OUT), jnp.float32),
        grid=grid,
        in_specs=in_specs,
        out_specs=rows(_OUT),
        compiler_params=pltpu.CompilerParams(dimension_semantics=("parallel",)),
    )(*args)


# --------------------------------------------------------------------------------------
# SSActor in JAX (parameters initialized deterministically in-script)
# --------------------------------------------------------------------------------------
class SSActorPallas:
    def __init__(self, key):
        k = jax.random.split(key, 8)
        # Parameters in PyTorch layouts (what a real SSActor checkpoint provides):
        # conv: OIHW weight + (cout,) bias; linear: stored pre-transposed as (in, out).
        w_c1 = 0.1 * jax.random.normal(k[0], (_C1, _IN_C, 3, 3), jnp.float32)
        b_c1 = 0.1 * jax.random.normal(k[1], (_C1,), jnp.float32)
        w_c2 = 0.1 * jax.random.normal(k[2], (_C2, _C1, 3, 3), jnp.float32)
        b_c2 = 0.1 * jax.random.normal(k[3], (_C2,), jnp.float32)
        w_f1 = 0.1 * jax.random.normal(k[4], (_FLAT, _HID), jnp.float32)
        b_f1 = 0.1 * jax.random.normal(k[5], (_HID,), jnp.float32)
        w_f2 = 0.1 * jax.random.normal(k[6], (_HID, _OUT), jnp.float32)
        b_f2 = 0.1 * jax.random.normal(k[7], (_OUT,), jnp.float32)
        self.torch_params = dict(w_c1=w_c1, b_c1=b_c1, w_c2=w_c2, b_c2=b_c2,
                                 w_f1=w_f1, b_f1=b_f1, w_f2=w_f2, b_f2=b_f2)

        # One-time folding: each strided conv becomes a dense matrix acting on the
        # NCHW-flattened activation (columns of W_eff = conv(e_i)), so the kernel needs
        # no im2col / padding / strided slices / transposes, and the conv2->Linear
        # boundary naturally matches nn.Flatten's (C, H, W) order.
        self.w1 = self._conv_as_dense(w_c1, _IN_C, _IN_H, _IN_W, 2, 1).astype(jnp.bfloat16)
        self.b1 = jnp.repeat(b_c1, _H1 * _W1).reshape(1, -1)            # (1, 512)
        self.w2 = self._conv_as_dense(w_c2, _C1, _H1, _W1, 2, 1).astype(jnp.bfloat16)
        self.b2 = jnp.repeat(b_c2, _H2 * _W2).reshape(1, -1)            # (1, 256)
        self.w3 = w_f1.astype(jnp.bfloat16)
        self.b3 = b_f1.reshape(1, -1)
        self.w4 = w_f2.astype(jnp.bfloat16)
        self.b4 = b_f2.reshape(1, -1)

        self.max_linear_vel = MAX_LINEAR_VELOCITY
        self.max_angular_vel = MAX_ANGULAR_VELOCITY

    @staticmethod
    def _conv_as_dense(w_oihw, cin, h, w, stride, pad):
        basis = jnp.eye(cin * h * w, dtype=jnp.float32).reshape(cin * h * w, cin, h, w)
        y = jax.lax.conv_general_dilated(
            basis, w_oihw, window_strides=(stride, stride),
            padding=((pad, pad), (pad, pad)),
            dimension_numbers=("NCHW", "OIHW", "NCHW"),
            precision=jax.lax.Precision.HIGHEST)
        return y.reshape(cin * h * w, -1)       # both axes in NCHW-flatten order

    def forward(self, inp, noise=0.0, rng=None):
        shape_len = inp.ndim
        if shape_len == 3:
            lead = (1,)
        elif shape_len == 4:
            lead = (inp.shape[0],)
        elif shape_len == 5:                    # fold leading dim into batch: one launch
            lead = (inp.shape[0], inp.shape[1])
        else:
            raise Exception("Invalid input shape")
        x2d = inp.astype(jnp.float32).reshape(-1, _IN_C * _IN_H * _IN_W)

        p = (self.w1, self.b1, self.w2, self.b2, self.w3, self.b3, self.w4, self.b4)
        if isinstance(noise, (int, float)) and float(noise) == 0.0:
            # Common inference path: no RNG, no noise input stream at all.
            out = _fused_forward(x2d, *p)
        else:
            # TODO(synk): torch.rand uses torch's implicit global RNG; JAX needs an
            #             explicit key — callers should pass `rng` for non-deterministic noise.
            if rng is None:
                rng = jax.random.PRNGKey(1)
            mult = jnp.array([self.max_linear_vel, self.max_angular_vel, 0.5], jnp.float32)
            u = jax.random.uniform(rng, (x2d.shape[0], _OUT), dtype=jnp.float32)
            noise_tensor = u * (2.0 * mult) - mult
            out = _fused_forward(x2d, *p, noise_tensor=noise_tensor, noise=noise)

        out = out.reshape(lead + (_OUT,))
        if out.shape[0] == 1:                   # torch .squeeze(0) semantics
            out = out[0]
        return out

    def reset(self):
        pass


# --------------------------------------------------------------------------------------
# Plain-JAX/XLA reference of the same module (for a correctness check only)
# --------------------------------------------------------------------------------------
def _reference_forward(params, x_nchw):
    dn = ("NCHW", "OIHW", "NCHW")
    hp = jax.lax.Precision.HIGHEST
    y = jax.lax.conv_general_dilated(x_nchw, params["w_c1"], (2, 2), ((1, 1), (1, 1)),
                                     dimension_numbers=dn, precision=hp)
    y = jnp.maximum(y + params["b_c1"][None, :, None, None], 0.0)
    y = jax.lax.conv_general_dilated(y, params["w_c2"], (2, 2), ((1, 1), (1, 1)),
                                     dimension_numbers=dn, precision=hp)
    y = jnp.maximum(y + params["b_c2"][None, :, None, None], 0.0)
    y = y.reshape(y.shape[0], -1)               # nn.Flatten: (C, H, W) order
    y = jnp.maximum(y @ params["w_f1"] + params["b_f1"], 0.0)
    y = y @ params["w_f2"] + params["b_f2"]
    mult = jnp.array([MAX_LINEAR_VELOCITY, MAX_ANGULAR_VELOCITY, 0.5], jnp.float32)
    add = jnp.array([0.0, 0.0, 0.5], jnp.float32)
    return jnp.tanh(y) * mult + add


# --------------------------------------------------------------------------------------
if __name__ == "__main__":
    key = jax.random.PRNGKey(0)
    k_param, k_input, k_input5 = jax.random.split(key, 3)

    actor = SSActorPallas(k_param)

    # batch=2, channels=4, spatial=16 (NCHW)
    x = jax.random.normal(k_input, (2, _IN_C, _IN_H, _IN_W), dtype=jnp.float32)

    out = jax.block_until_ready(actor.forward(x, noise=0.0))
    assert out.shape == (2, 3), out.shape
    assert bool(jnp.all(jnp.isfinite(out)))
    # linear/angular bounded by tanh*max_vel, third channel in [0, 1]
    assert bool(jnp.all(jnp.abs(out[:, 0]) <= MAX_LINEAR_VELOCITY + 1e-5))
    assert bool(jnp.all(jnp.abs(out[:, 1]) <= MAX_ANGULAR_VELOCITY + 1e-5))
    assert bool(jnp.all((out[:, 2] >= -1e-5) & (out[:, 2] <= 1.0 + 1e-5)))

    # numerics vs plain-JAX reference (bf16 matmul operands in the kernel -> loose tol)
    ref = _reference_forward(actor.torch_params, x)
    assert bool(jnp.allclose(out, ref, atol=5e-2)), (out, ref)

    # 5-D path: leading dim folded into the batch; still a single kernel launch
    x5 = jax.random.normal(k_input5, (3, 2, _IN_C, _IN_H, _IN_W), dtype=jnp.float32)
    out5 = jax.block_until_ready(actor.forward(x5, noise=0.0))
    assert out5.shape == (3, 2, 3), out5.shape
    assert bool(jnp.all(jnp.isfinite(out5)))

    # noisy path: RNG generated wrapper-side, noise scalar rides in SMEM
    outn = jax.block_until_ready(actor.forward(x, noise=0.25, rng=jax.random.PRNGKey(7)))
    assert outn.shape == (2, 3), outn.shape
    assert bool(jnp.all(jnp.isfinite(outn)))
    assert bool(jnp.all(jnp.abs(outn[:, 0]) <= MAX_LINEAR_VELOCITY + 1e-5))
    assert bool(jnp.all((outn[:, 2] >= -1e-5) & (outn[:, 2] <= 1.0 + 1e-5)))

    print("KERNEL_OK")
</pallas_src>

<mosaic_0001>
module attributes {stable_mosaic.version = 11 : i64} {
  func.func @_fused_kernel(%arg0: i32, %arg1: memref<2x1024xf32, #tpu.memory_space<vmem>>, %arg2: memref<1024x512xbf16, #tpu.memory_space<vmem>>, %arg3: memref<1x512xf32, #tpu.memory_space<vmem>>, %arg4: memref<512x256xbf16, #tpu.memory_space<vmem>>, %arg5: memref<1x256xf32, #tpu.memory_space<vmem>>, %arg6: memref<256x32xbf16, #tpu.memory_space<vmem>>, %arg7: memref<1x32xf32, #tpu.memory_space<vmem>>, %arg8: memref<32x3xbf16, #tpu.memory_space<vmem>>, %arg9: memref<1x3xf32, #tpu.memory_space<vmem>>, %arg10: memref<2x3xf32, #tpu.memory_space<vmem>>) attributes {dimension_semantics = [#tpu.dimension_semantics<parallel>], iteration_bounds = array<i64: 1>, scalar_prefetch = 0 : i64, scratch_operands = 0 : i64, tpu.core_type = #tpu.core_type<tc>, window_params = [{transform_indices = @transform_0, window_bounds = array<i64: 2, 1024>}, {pipeline_mode = #tpu.pipeline_mode<synchronous>, transform_indices = @transform_1, window_bounds = array<i64: 1024, 512>}, {pipeline_mode = #tpu.pipeline_mode<synchronous>, transform_indices = @transform_2, window_bounds = array<i64: 1, 512>}, {pipeline_mode = #tpu.pipeline_mode<synchronous>, transform_indices = @transform_3, window_bounds = array<i64: 512, 256>}, {pipeline_mode = #tpu.pipeline_mode<synchronous>, transform_indices = @transform_4, window_bounds = array<i64: 1, 256>}, {pipeline_mode = #tpu.pipeline_mode<synchronous>, transform_indices = @transform_5, window_bounds = array<i64: 256, 32>}, {pipeline_mode = #tpu.pipeline_mode<synchronous>, transform_indices = @transform_6, window_bounds = array<i64: 1, 32>}, {pipeline_mode = #tpu.pipeline_mode<synchronous>, transform_indices = @transform_7, window_bounds = array<i64: 32, 3>}, {pipeline_mode = #tpu.pipeline_mode<synchronous>, transform_indices = @transform_8, window_bounds = array<i64: 1, 3>}, {transform_indices = @transform_9, window_bounds = array<i64: 2, 3>}]} {
    %c0 = arith.constant 0 : index
    %c0_0 = arith.constant 0 : index
    %0 = vector.load %arg1[%c0, %c0_0] : memref<2x1024xf32, #tpu.memory_space<vmem>>, vector<2x1024xf32>
    %1 = arith.truncf %0 : vector<2x1024xf32> to vector<2x1024xbf16>
    %c0_1 = arith.constant 0 : index
    %c0_2 = arith.constant 0 : index
    %2 = vector.load %arg2[%c0_1, %c0_2] : memref<1024x512xbf16, #tpu.memory_space<vmem>>, vector<1024x512xbf16>
    %cst = arith.constant dense<0.000000e+00> : vector<2x512xf32>
    %3 = tpu.matmul %1, %2, %cst {dimension_numbers = #tpu.dot_dimension_numbers<[1], [0], [0], [1], [0, 0, 1, 1], [], []>} : vector<2x1024xbf16>, vector<1024x512xbf16>, vector<2x512xf32> -> vector<2x512xf32>
    %c0_3 = arith.constant 0 : index
    %c0_4 = arith.constant 0 : index
    %4 = vector.load %arg3[%c0_3, %c0_4] : memref<1x512xf32, #tpu.memory_space<vmem>>, vector<1x512xf32>
    %5 = vector.broadcast %4 : vector<1x512xf32> to vector<2x512xf32>
    %6 = arith.addf %3, %5 : vector<2x512xf32>
    %cst_5 = arith.constant 0.000000e+00 : f32
    %7 = vector.broadcast %cst_5 : f32 to vector<2x512xf32>
    %8 = arith.maximumf %6, %7 : vector<2x512xf32>
    %9 = arith.truncf %8 : vector<2x512xf32> to vector<2x512xbf16>
    %c0_6 = arith.constant 0 : index
    %c0_7 = arith.constant 0 : index
    %10 = vector.load %arg4[%c0_6, %c0_7] : memref<512x256xbf16, #tpu.memory_space<vmem>>, vector<512x256xbf16>
    %cst_8 = arith.constant dense<0.000000e+00> : vector<2x256xf32>
    %11 = tpu.matmul %9, %10, %cst_8 {dimension_numbers = #tpu.dot_dimension_numbers<[1], [0], [0], [1], [0, 0, 1, 1], [], []>} : vector<2x512xbf16>, vector<512x256xbf16>, vector<2x256xf32> -> vector<2x256xf32>
    %c0_9 = arith.constant 0 : index
    %c0_10 = arith.constant 0 : index
    %12 = vector.load %arg5[%c0_9, %c0_10] : memref<1x256xf32, #tpu.memory_space<vmem>>, vector<1x256xf32>
    %13 = vector.broadcast %12 : vector<1x256xf32> to vector<2x256xf32>
    %14 = arith.addf %11, %13 : vector<2x256xf32>
    %cst_11 = arith.constant 0.000000e+00 : f32
    %15 = vector.broadcast %cst_11 : f32 to vector<2x256xf32>
    %16 = arith.maximumf %14, %15 : vector<2x256xf32>
    %17 = arith.truncf %16 : vector<2x256xf32> to vector<2x256xbf16>
    %c0_12 = arith.constant 0 : index
    %c0_13 = arith.constant 0 : index
    %18 = vector.load %arg6[%c0_12, %c0_13] : memref<256x32xbf16, #tpu.memory_space<vmem>>, vector<256x32xbf16>
    %cst_14 = arith.constant dense<0.000000e+00> : vector<2x32xf32>
    %19 = tpu.matmul %17, %18, %cst_14 {dimension_numbers = #tpu.dot_dimension_numbers<[1], [0], [0], [1], [0, 0, 1, 1], [], []>} : vector<2x256xbf16>, vector<256x32xbf16>, vector<2x32xf32> -> vector<2x32xf32>
    %c0_15 = arith.constant 0 : index
    %c0_16 = arith.constant 0 : index
    %20 = vector.load %arg7[%c0_15, %c0_16] : memref<1x32xf32, #tpu.memory_space<vmem>>, vector<1x32xf32>
    %21 = vector.broadcast %20 : vector<1x32xf32> to vector<2x32xf32>
    %22 = arith.addf %19, %21 : vector<2x32xf32>
    %cst_17 = arith.constant 0.000000e+00 : f32
    %23 = vector.broadcast %cst_17 : f32 to vector<2x32xf32>
    %24 = arith.maximumf %22, %23 : vector<2x32xf32>
    %25 = arith.truncf %24 : vector<2x32xf32> to vector<2x32xbf16>
    %c0_18 = arith.constant 0 : index
    %c0_19 = arith.constant 0 : index
    %26 = vector.load %arg8[%c0_18, %c0_19] : memref<32x3xbf16, #tpu.memory_space<vmem>>, vector<32x3xbf16>
    %cst_20 = arith.constant dense<0.000000e+00> : vector<2x3xf32>
    %27 = tpu.matmul %25, %26, %cst_20 {dimension_numbers = #tpu.dot_dimension_numbers<[1], [0], [0], [1], [0, 0, 1, 1], [], []>} : vector<2x32xbf16>, vector<32x3xbf16>, vector<2x3xf32> -> vector<2x3xf32>
    %c0_21 = arith.constant 0 : index
    %c0_22 = arith.constant 0 : index
    %28 = vector.load %arg9[%c0_21, %c0_22] : memref<1x3xf32, #tpu.memory_space<vmem>>, vector<1x3xf32>
    %29 = vector.broadcast %28 : vector<1x3xf32> to vector<2x3xf32>
    %30 = arith.addf %27, %29 : vector<2x3xf32>
    %31 = tpu.iota {dimensions = array<i32: 1>} : vector<2x3xi32>
    %c0_i32 = arith.constant 0 : i32
    %32 = vector.broadcast %c0_i32 : i32 to vector<2x3xi32>
    %33 = arith.cmpi eq, %31, %32 : vector<2x3xi32>
    %c1_i32 = arith.constant 1 : i32
    %34 = vector.broadcast %c1_i32 : i32 to vector<2x3xi32>
    %35 = arith.cmpi eq, %31, %34 : vector<2x3xi32>
    %cst_23 = arith.constant 1.000000e+00 : f32
    %cst_24 = arith.constant 5.000000e-01 : f32
    %36 = vector.broadcast %cst_23 : f32 to vector<2x3xf32>
    %37 = vector.broadcast %cst_24 : f32 to vector<2x3xf32>
    %38 = arith.select %35, %36, %37 : vector<2x3xi1>, vector<2x3xf32>
    %cst_25 = arith.constant 1.000000e+00 : f32
    %39 = vector.broadcast %cst_25 : f32 to vector<2x3xf32>
    %40 = arith.select %33, %39, %38 : vector<2x3xi1>, vector<2x3xf32>
    %c2_i32 = arith.constant 2 : i32
    %41 = vector.broadcast %c2_i32 : i32 to vector<2x3xi32>
    %42 = arith.cmpi eq, %31, %41 : vector<2x3xi32>
    %cst_26 = arith.constant 5.000000e-01 : f32
    %cst_27 = arith.constant 0.000000e+00 : f32
    %43 = vector.broadcast %cst_26 : f32 to vector<2x3xf32>
    %44 = vector.broadcast %cst_27 : f32 to vector<2x3xf32>
    %45 = arith.select %42, %43, %44 : vector<2x3xi1>, vector<2x3xf32>
    %46 = math.tanh %30 : vector<2x3xf32>
    %47 = arith.mulf %46, %40 : vector<2x3xf32>
    %48 = arith.addf %47, %45 : vector<2x3xf32>
    %c0_28 = arith.constant 0 : index
    %c0_29 = arith.constant 0 : index
    %49 = vector.load %arg10[%c0_28, %c0_29] : memref<2x3xf32, #tpu.memory_space<vmem>>, vector<2x3xf32>
    tpu.vector_store %arg10[%c0_28, %c0_29], %48 {strides = array<i32>} : memref<2x3xf32, #tpu.memory_space<vmem>>, vector<2x3xf32>,
    return
  }
  func.func @transform_0(%arg0: i32) -> (i32, i32) {
    %c0_i32 = arith.constant 0 : i32
    %c0_i32_0 = arith.constant 0 : i32
    return %arg0, %c0_i32 : i32, i32
  }
  func.func @transform_1(%arg0: i32) -> (i32, i32) {
    %c0_i32 = arith.constant 0 : i32
    %c0_i32_0 = arith.constant 0 : i32
    %c0_i32_1 = arith.constant 0 : i32
    return %c0_i32, %c0_i32_0 : i32, i32
  }
  func.func @transform_2(%arg0: i32) -> (i32, i32) {
    %c0_i32 = arith.constant 0 : i32
    %c0_i32_0 = arith.constant 0 : i32
    %c0_i32_1 = arith.constant 0 : i32
    return %c0_i32, %c0_i32_0 : i32, i32
  }
  func.func @transform_3(%arg0: i32) -> (i32, i32) {
    %c0_i32 = arith.constant 0 : i32
    %c0_i32_0 = arith.constant 0 : i32
    %c0_i32_1 = arith.constant 0 : i32
    return %c0_i32, %c0_i32_0 : i32, i32
  }
  func.func @transform_4(%arg0: i32) -> (i32, i32) {
    %c0_i32 = arith.constant 0 : i32
    %c0_i32_0 = arith.constant 0 : i32
    %c0_i32_1 = arith.constant 0 : i32
    return %c0_i32, %c0_i32_0 : i32, i32
  }
  func.func @transform_5(%arg0: i32) -> (i32, i32) {
    %c0_i32 = arith.constant 0 : i32
    %c0_i32_0 = arith.constant 0 : i32
    %c0_i32_1 = arith.constant 0 : i32
    return %c0_i32, %c0_i32_0 : i32, i32
  }
  func.func @transform_6(%arg0: i32) -> (i32, i32) {
    %c0_i32 = arith.constant 0 : i32
    %c0_i32_0 = arith.constant 0 : i32
    %c0_i32_1 = arith.constant 0 : i32
    return %c0_i32, %c0_i32_0 : i32, i32
  }
  func.func @transform_7(%arg0: i32) -> (i32, i32) {
    %c0_i32 = arith.constant 0 : i32
    %c0_i32_0 = arith.constant 0 : i32
    %c0_i32_1 = arith.constant 0 : i32
    return %c0_i32, %c0_i32_0 : i32, i32
  }
  func.func @transform_8(%arg0: i32) -> (i32, i32) {
    %c0_i32 = arith.constant 0 : i32
    %c0_i32_0 = arith.constant 0 : i32
    %c0_i32_1 = arith.constant 0 : i32
    return %c0_i32, %c0_i32_0 : i32, i32
  }
  func.func @transform_9(%arg0: i32) -> (i32, i32) {
    %c0_i32 = arith.constant 0 : i32
    %c0_i32_0 = arith.constant 0 : i32
    return %arg0, %c0_i32 : i32, i32
  }
}

</mosaic_0001>

<llo_original>
// kernel: _fused_forward.1
$region0: #{_fused_forward.1}
  #allocation0 [shape = 'u32[]', space=smem, size = 0x4, offset = 0x4, fixed_abs, tag = 'smem constant byte address 0x4 - core index']
  #allocation1 [shape = 'u32[72,128]{1,0:T(1,128)}', space=vmem, size = 0x9000, scoped, tag = 'internal scratch']
  %s0 = inlined_call_operand.vmem [shape: f32[2,1024], index: 0, kind: input, shape index: {}]
  %s1 = inlined_call_operand.hbm [shape: bf16[1024,512], index: 1, kind: input, shape index: {}]
  %s2 = inlined_call_operand.vmem [shape: f32[1,512], index: 2, kind: input, shape index: {}]
  %s3 = inlined_call_operand.hbm [shape: bf16[512,256], index: 3, kind: input, shape index: {}]
  %s4 = inlined_call_operand.vmem [shape: f32[1,256], index: 4, kind: input, shape index: {}]
  %s5 = inlined_call_operand.vmem [shape: bf16[256,32], index: 5, kind: input, shape index: {}]
  %s6 = inlined_call_operand.vmem [shape: f32[1,32], index: 6, kind: input, shape index: {}]
  %s7 = inlined_call_operand.vmem [shape: bf16[32,3], index: 7, kind: input, shape index: {}]
  %s8 = inlined_call_operand.vmem [shape: f32[1,3], index: 8, kind: input, shape index: {}]
  %s9 = inlined_call_operand.hbm [shape: f32[2,3], index: 9, kind: output, shape index: {}]
  %s10 = sld [smem:[#allocation0]]
  $region54: #{_fused_forward.1} parent=0
    _
  %s12 = ssub.s32 1, %s10
  %s13 = scalar_select 0, %s12, %s10
  $region1: #{_fused_forward.1} parent=0
    #allocation2 [shape = 'u8[1048576]{0}', space=vmem, size = 0x100000, scoped, tag = 'input window, operand 1, single buffered']
    #allocation3 [shape = 's32[1]{0}', space=sflag, size = 0x4, scoped, tag = 'scoped memory for _fused_forward.1']
    #allocation4 [shape = 's32[1]{0}', space=sflag, size = 0x4, scoped, tag = 'scoped memory for _fused_forward.1']
    #allocation5 [shape = 'u8[262144]{0}', space=vmem, size = 0x40000, scoped, tag = 'input window, operand 3, single buffered']
    #allocation6 [shape = 's32[1]{0}', space=sflag, size = 0x4, scoped, tag = 'scoped memory for _fused_forward.1']
    #allocation7 [shape = 'u8[1024]{0}', space=vmem, size = 0x400, scoped, tag = 'output window, operand 0, single buffered']
    %14 = vsyncpa [#allocation3], 0
    %15 = vsyncpa [#allocation6], 0
    %16 = vsyncpa [#allocation4], 0
    // Predicated region
    $region2: #{_fused_forward.1} parent=1 // pred_check
      _
    $region3: #{_fused_forward.1} parent=1 // pred_check_branch
      %18 = sbr.rel (0) target = $region5
    $region4: #{_fused_forward.1} parent=1 // pred_region
      _
    $region5: #{_fused_forward.1} parent=1 // pred_fallthru
      _
    // Predicated region
    $region6: #{_fused_forward.1} parent=1 // pred_check
      _
    $region7: #{_fused_forward.1} parent=1 // pred_check_branch
      %20 = sbr.rel (0) target = $region9
    $region8: #{_fused_forward.1} parent=1 // pred_region
      %22 = vsyncadd [#allocation3], 0
      %s23 = sshll.u32 %s1, 4
      %s24 = int_to_ptr.hbm [resolvable:$true] %s23
      %s25 = sshll.u32 [#allocation2], 4
      %s26 = int_to_ptr.vmem [resolvable:$true] %s25
      %31 = dma.hbm_to_vmem [thread:$0]  %s24, 32768, %s26, [#allocation3], 256, 256, 16
    $region9: #{_fused_forward.1} parent=1 // pred_fallthru
      _
    // Predicated region
    $region10: #{_fused_forward.1} parent=1 // pred_check
      _
    $region11: #{_fused_forward.1} parent=1 // pred_check_branch
      %33 = sbr.rel (0) target = $region13
    $region12: #{_fused_forward.1} parent=1 // pred_region
      _
    $region13: #{_fused_forward.1} parent=1 // pred_fallthru
      _
    // Predicated region
    $region14: #{_fused_forward.1} parent=1 // pred_check
      _
    $region15: #{_fused_forward.1} parent=1 // pred_check_branch
      %35 = sbr.rel (0) target = $region17
    $region16: #{_fused_forward.1} parent=1 // pred_region
      %37 = vsyncadd [#allocation6], 0
      %s38 = sshll.u32 %s3, 4
      %s39 = int_to_ptr.hbm [resolvable:$true] %s38
      %s40 = sshll.u32 [#allocation5], 4
      %s41 = int_to_ptr.vmem [resolvable:$true] %s40
      %46 = dma.hbm_to_vmem [thread:$0]  %s39, 8192, %s41, [#allocation6], 128, 128, 8
    $region17: #{_fused_forward.1} parent=1 // pred_fallthru
      _
    // Predicated region
    $region18: #{_fused_forward.1} parent=1 // pred_check
      _
    $region19: #{_fused_forward.1} parent=1 // pred_check_branch
      %48 = sbr.rel (0) target = $region21
    $region20: #{_fused_forward.1} parent=1 // pred_region
      _
    $region21: #{_fused_forward.1} parent=1 // pred_fallthru
      _
    // Predicated region
    $region22: #{_fused_forward.1} parent=1 // pred_check
      _
    $region23: #{_fused_forward.1} parent=1 // pred_check_branch
      %50 = sbr.rel (0) target = $region25
    $region24: #{_fused_forward.1} parent=1 // pred_region
      _
    $region25: #{_fused_forward.1} parent=1 // pred_fallthru
      _
    // Predicated region
    $region26: #{_fused_forward.1} parent=1 // pred_check
      _
    $region27: #{_fused_forward.1} parent=1 // pred_check_branch
      %52 = sbr.rel (0) target = $region29
    $region28: #{_fused_forward.1} parent=1 // pred_region
      _
    $region29: #{_fused_forward.1} parent=1 // pred_fallthru
      _
    // Predicated region
    $region30: #{_fused_forward.1} parent=1 // pred_check
      _
    $region31: #{_fused_forward.1} parent=1 // pred_check_branch
      %54 = sbr.rel (0) target = $region33
    $region32: #{_fused_forward.1} parent=1 // pred_region
      _
    $region33: #{_fused_forward.1} parent=1 // pred_fallthru
      _
    // Predicated region
    $region34: #{_fused_forward.1} parent=1 // pred_check
      _
    $region35: #{_fused_forward.1} parent=1 // pred_check_branch
      %56 = sbr.rel (0) target = $region37
    $region36: #{_fused_forward.1} parent=1 // pred_region
      _
    $region37: #{_fused_forward.1} parent=1 // pred_fallthru
      _
    // Predicated region
    $region38: #{_fused_forward.1} parent=1 // pred_check
      _
    $region39: #{_fused_forward.1} parent=1 // pred_check_branch
      %58 = sbr.rel (0) target = $region41
    $region40: #{_fused_forward.1} parent=1 // pred_region
      %60 = dma.done [#allocation3], 32768
    $region41: #{_fused_forward.1} parent=1 // pred_fallthru
      _
    // Predicated region
    $region42: #{_fused_forward.1} parent=1 // pred_check
      _
    $region43: #{_fused_forward.1} parent=1 // pred_check_branch
      %62 = sbr.rel (0) target = $region45
    $region44: #{_fused_forward.1} parent=1 // pred_region
      %64 = dma.done [#allocation6], 8192
    $region45: #{_fused_forward.1} parent=1 // pred_fallthru
      _
    %v66 = vld [vmem:[%s0] sm:$0xff]
    %v67 = vld [vmem:[%s0 + $0x8] sm:$0xff]
    %70 = vst [vmem:[#allocation1] ss:$4 sm:$0xff] %v66
    %s71 = scalar_lea.vmem [#allocation1], 32
    %72 = vst [vmem:[%s71] ss:$4 sm:$0xff] %v67
    %v73 = vld.sshfl [vmem:[#allocation1] sm:$0xff pattern:$0x73625140]
    %v74 = vld.sshfl [vmem:[#allocation1 + $0x8] sm:$0xff pattern:$0x73625140]
    %v75 = vld.sshfl [vmem:[#allocation1 + $0x10] sm:$0xff pattern:$0x73625140]
    %v76 = vld.sshfl [vmem:[#allocation1 + $0x18] sm:$0xff pattern:$0x73625140]
    %v77 = vld.sshfl [vmem:[#allocation1 + $0x20] sm:$0xff pattern:$0x73625140]
    %v78 = vld.sshfl [vmem:[#allocation1 + $0x28] sm:$0xff pattern:$0x73625140]
    %v79 = vld.sshfl [vmem:[#allocation1 + $0x30] sm:$0xff pattern:$0x73625140]
    %v80 = vld.sshfl [vmem:[#allocation1 + $0x38] sm:$0xff pattern:$0x73625140]
    %v89 = vpack.c.bf16 %v73, %v73
    %v90 = vpack.c.bf16 %v74, %v74
    %v91 = vpack.c.bf16 %v75, %v75
    %v92 = vpack.c.bf16 %v76, %v76
    %v93 = vpack.c.bf16 %v77, %v77
    %v94 = vpack.c.bf16 %v78, %v78
    %v95 = vpack.c.bf16 %v79, %v79
    %v96 = vpack.c.bf16 %v80, %v80
    %v97 = vld [vmem:[#allocation2] sm:$0xff]
    %v98 = vld [vmem:[#allocation2 + $0x8] sm:$0xff]
    %v99 = vld [vmem:[#allocation2 + $0x10] sm:$0xff]
    %v100 = vld [vmem:[#allocation2 + $0x18] sm:$0xff]
    %v101 = vld [vmem:[#allocation2 + $0x20] sm:$0xff]
    %v102 = vld [vmem:[#allocation2 + $0x28] sm:$0xff]
    %v103 = vld [vmem:[#allocation2 + $0x30] sm:$0xff]
    %v104 = vld [vmem:[#allocation2 + $0x38] sm:$0xff]
    %v105 = vld [vmem:[#allocation2 + $0x40] sm:$0xff]
    %v106 = vld [vmem:[#allocation2 + $0x48] sm:$0xff]
    %v107 = vld [vmem:[#allocation2 + $0x50] sm:$0xff]
    %v108 = vld [vmem:[#allocation2 + $0x58] sm:$0xff]
    %v109 = vld [vmem:[#allocation2 + $0x60] sm:$0xff]
    %v110 = vld [vmem:[#allocation2 + $0x68] sm:$0xff]
    %v111 = vld [vmem:[#allocation2 + $0x70] sm:$0xff]
    %v112 = vld [vmem:[#allocation2 + $0x78] sm:$0xff]
    %v113 = vld [vmem:[#allocation2 + $0x80] sm:$0xff]
    %v114 = vld [vmem:[#allocation2 + $0x88] sm:$0xff]
    %v115 = vld [vmem:[#allocation2 + $0x90] sm:$0xff]
    %v116 = vld [vmem:[#allocation2 + $0x98] sm:$0xff]
    %v117 = vld [vmem:[#allocation2 + $0xa0] sm:$0xff]
    %v118 = vld [vmem:[#allocation2 + $0xa8] sm:$0xff]
    %v119 = vld [vmem:[#allocation2 + $0xb0] sm:$0xff]
    %v120 = vld [vmem:[#allocation2 + $0xb8] sm:$0xff]
    %v121 = vld [vmem:[#allocation2 + $0xc0] sm:$0xff]
    %v122 = vld [vmem:[#allocation2 + $0xc8] sm:$0xff]
    %v123 = vld [vmem:[#allocation2 + $0xd0] sm:$0xff]
    %v124 = vld [vmem:[#allocation2 + $0xd8] sm:$0xff]
    %v125 = vld [vmem:[#allocation2 + $0xe0] sm:$0xff]
    %v126 = vld [vmem:[#allocation2 + $0xe8] sm:$0xff]
    %v127 = vld [vmem:[#allocation2 + $0xf0] sm:$0xff]
    %v128 = vld [vmem:[#allocation2 + $0xf8] sm:$0xff]
    %v129 = vld [vmem:[#allocation2 + $0x100] sm:$0xff]
    %v130 = vld [vmem:[#allocation2 + $0x108] sm:$0xff]
    %v131 = vld [vmem:[#allocation2 + $0x110] sm:$0xff]
    %v132 = vld [vmem:[#allocation2 + $0x118] sm:$0xff]
    %v133 = vld [vmem:[#allocation2 + $0x120] sm:$0xff]
    %v134 = vld [vmem:[#allocation2 + $0x128] sm:$0xff]
    %v135 = vld [vmem:[#allocation2 + $0x130] sm:$0xff]
    %v136 = vld [vmem:[#allocation2 + $0x138] sm:$0xff]
    %v137 = vld [vmem:[#allocation2 + $0x140] sm:$0xff]
    %v138 = vld [vmem:[#allocation2 + $0x148] sm:$0xff]
    %v139 = vld [vmem:[#allocation2 + $0x150] sm:$0xff]
    %v140 = vld [vmem:[#allocation2 + $0x158] sm:$0xff]
    %v141 = vld [vmem:[#allocation2 + $0x160] sm:$0xff]
    %v142 = vld [vmem:[#allocation2 + $0x168] sm:$0xff]
    %v143 = vld [vmem:[#allocation2 + $0x170] sm:$0xff]
    %v144 = vld [vmem:[#allocation2 + $0x178] sm:$0xff]
    %v145 = vld [vmem:[#allocation2 + $0x180] sm:$0xff]
    %v146 = vld [vmem:[#allocation2 + $0x188] sm:$0xff]
    %v147 = vld [vmem:[#allocation2 + $0x190] sm:$0xff]
    %v148 = vld [vmem:[#allocation2 + $0x198] sm:$0xff]
    %v149 = vld [vmem:[#allocation2 + $0x1a0] sm:$0xff]
    %v150 = vld [vmem:[#allocation2 + $0x1a8] sm:$0xff]
    %v151 = vld [vmem:[#allocation2 + $0x1b0] sm:$0xff]
    %v152 = vld [vmem:[#allocation2 + $0x1b8] sm:$0xff]
    %v153 = vld [vmem:[#allocation2 + $0x1c0] sm:$0xff]
    %v154 = vld [vmem:[#allocation2 + $0x1c8] sm:$0xff]
    %v155 = vld [vmem:[#allocation2 + $0x1d0] sm:$0xff]
    %v156 = vld [vmem:[#allocation2 + $0x1d8] sm:$0xff]
    %v157 = vld [vmem:[#allocation2 + $0x1e0] sm:$0xff]
    %v158 = vld [vmem:[#allocation2 + $0x1e8] sm:$0xff]
    %v159 = vld [vmem:[#allocation2 + $0x1f0] sm:$0xff]
    %v160 = vld [vmem:[#allocation2 + $0x1f8] sm:$0xff]
    %v161 = vld [vmem:[#allocation2 + $0x200] sm:$0xff]
    %v162 = vld [vmem:[#allocation2 + $0x208] sm:$0xff]
    %v163 = vld [vmem:[#allocation2 + $0x210] sm:$0xff]
    %v164 = vld [vmem:[#allocation2 + $0x218] sm:$0xff]
    %v165 = vld [vmem:[#allocation2 + $0x220] sm:$0xff]
    %v166 = vld [vmem:[#allocation2 + $0x228] sm:$0xff]
    %v167 = vld [vmem:[#allocation2 + $0x230] sm:$0xff]
    %v168 = vld [vmem:[#allocation2 + $0x238] sm:$0xff]
    %v169 = vld [vmem:[#allocation2 + $0x240] sm:$0xff]
    %v170 = vld [vmem:[#allocation2 + $0x248] sm:$0xff]
    %v171 = vld [vmem:[#allocation2 + $0x250] sm:$0xff]
    %v172 = vld [vmem:[#allocation2 + $0x258] sm:$0xff]
    %v173 = vld [vmem:[#allocation2 + $0x260] sm:$0xff]
    %v174 = vld [vmem:[#allocation2 + $0x268] sm:$0xff]
    %v175 = vld [vmem:[#allocation2 + $0x270] sm:$0xff]
    %v176 = vld [vmem:[#allocation2 + $0x278] sm:$0xff]
    %v177 = vld [vmem:[#allocation2 + $0x280] sm:$0xff]
    %v178 = vld [vmem:[#allocation2 + $0x288] sm:$0xff]
    %v179 = vld [vmem:[#allocation2 + $0x290] sm:$0xff]
    %v180 = vld [vmem:[#allocation2 + $0x298] sm:$0xff]
    %v181 = vld [vmem:[#allocation2 + $0x2a0] sm:$0xff]
    %v182 = vld [vmem:[#allocation2 + $0x2a8] sm:$0xff]
    %v183 = vld [vmem:[#allocation2 + $0x2b0] sm:$0xff]
    %v184 = vld [vmem:[#allocation2 + $0x2b8] sm:$0xff]
    %v185 = vld [vmem:[#allocation2 + $0x2c0] sm:$0xff]
    %v186 = vld [vmem:[#allocation2 + $0x2c8] sm:$0xff]
    %v187 = vld [vmem:[#allocation2 + $0x2d0] sm:$0xff]
    %v188 = vld [vmem:[#allocation2 + $0x2d8] sm:$0xff]
    %v189 = vld [vmem:[#allocation2 + $0x2e0] sm:$0xff]
    %v190 = vld [vmem:[#allocation2 + $0x2e8] sm:$0xff]
    %v191 = vld [vmem:[#allocation2 + $0x2f0] sm:$0xff]
    %v192 = vld [vmem:[#allocation2 + $0x2f8] sm:$0xff]
    %v193 = vld [vmem:[#allocation2 + $0x300] sm:$0xff]
    %v194 = vld [vmem:[#allocation2 + $0x308] sm:$0xff]
    %v195 = vld [vmem:[#allocation2 + $0x310] sm:$0xff]
    %v196 = vld [vmem:[#allocation2 + $0x318] sm:$0xff]
    %v197 = vld [vmem:[#allocation2 + $0x320] sm:$0xff]
    %v198 = vld [vmem:[#allocation2 + $0x328] sm:$0xff]
    %v199 = vld [vmem:[#allocation2 + $0x330] sm:$0xff]
    %v200 = vld [vmem:[#allocation2 + $0x338] sm:$0xff]
    %v201 = vld [vmem:[#allocation2 + $0x340] sm:$0xff]
    %v202 = vld [vmem:[#allocation2 + $0x348] sm:$0xff]
    %v203 = vld [vmem:[#allocation2 + $0x350] sm:$0xff]
    %v204 = vld [vmem:[#allocation2 + $0x358] sm:$0xff]
    %v205 = vld [vmem:[#allocation2 + $0x360] sm:$0xff]
    %v206 = vld [vmem:[#allocation2 + $0x368] sm:$0xff]
    %v207 = vld [vmem:[#allocation2 + $0x370] sm:$0xff]
    %v208 = vld [vmem:[#allocation2 + $0x378] sm:$0xff]
    %v209 = vld [vmem:[#allocation2 + $0x380] sm:$0xff]
    %v210 = vld [vmem:[#allocation2 + $0x388] sm:$0xff]
    %v211 = vld [vmem:[#allocation2 + $0x390] sm:$0xff]
    %v212 = vld [vmem:[#allocation2 + $0x398] sm:$0xff]
    %v213 = vld [vmem:[#allocation2 + $0x3a0] sm:$0xff]
    %v214 = vld [vmem:[#allocation2 + $0x3a8] sm:$0xff]
    %v215 = vld [vmem:[#allocation2 + $0x3b0] sm:$0xff]
    %v216 = vld [vmem:[#allocation2 + $0x3b8] sm:$0xff]
    %v217 = vld [vmem:[#allocation2 + $0x3c0] sm:$0xff]
    %v218 = vld [vmem:[#allocation2 + $0x3c8] sm:$0xff]
    %v219 = vld [vmem:[#allocation2 + $0x3d0] sm:$0xff]
    %v220 = vld [vmem:[#allocation2 + $0x3d8] sm:$0xff]
    %v221 = vld [vmem:[#allocation2 + $0x3e0] sm:$0xff]
    %v222 = vld [vmem:[#allocation2 + $0x3e8] sm:$0xff]
    %v223 = vld [vmem:[#allocation2 + $0x3f0] sm:$0xff]
    %v224 = vld [vmem:[#allocation2 + $0x3f8] sm:$0xff]
    %v225 = vld [vmem:[#allocation2 + $0x400] sm:$0xff]
    %v226 = vld [vmem:[#allocation2 + $0x408] sm:$0xff]
    %v227 = vld [vmem:[#allocation2 + $0x410] sm:$0xff]
    %v228 = vld [vmem:[#allocation2 + $0x418] sm:$0xff]
    %v229 = vld [vmem:[#allocation2 + $0x420] sm:$0xff]
    %v230 = vld [vmem:[#allocation2 + $0x428] sm:$0xff]
    %v231 = vld [vmem:[#allocation2 + $0x430] sm:$0xff]
    %v232 = vld [vmem:[#allocation2 + $0x438] sm:$0xff]
    %v233 = vld [vmem:[#allocation2 + $0x440] sm:$0xff]
    %v234 = vld [vmem:[#allocation2 + $0x448] sm:$0xff]
    %v235 = vld [vmem:[#allocation2 + $0x450] sm:$0xff]
    %v236 = vld [vmem:[#allocation2 + $0x458] sm:$0xff]
    %v237 = vld [vmem:[#allocation2 + $0x460] sm:$0xff]
    %v238 = vld [vmem:[#allocation2 + $0x468] sm:$0xff]
    %v239 = vld [vmem:[#allocation2 + $0x470] sm:$0xff]
    %v240 = vld [vmem:[#allocation2 + $0x478] sm:$0xff]
    %v241 = vld [vmem:[#allocation2 + $0x480] sm:$0xff]
    %v242 = vld [vmem:[#allocation2 + $0x488] sm:$0xff]
    %v243 = vld [vmem:[#allocation2 + $0x490] sm:$0xff]
    %v244 = vld [vmem:[#allocation2 + $0x498] sm:$0xff]
    %v245 = vld [vmem:[#allocation2 + $0x4a0] sm:$0xff]
    %v246 = vld [vmem:[#allocation2 + $0x4a8] sm:$0xff]
    %v247 = vld [vmem:[#allocation2 + $0x4b0] sm:$0xff]
    %v248 = vld [vmem:[#allocation2 + $0x4b8] sm:$0xff]
    %v249 = vld [vmem:[#allocation2 + $0x4c0] sm:$0xff]
    %v250 = vld [vmem:[#allocation2 + $0x4c8] sm:$0xff]
    %v251 = vld [vmem:[#allocation2 + $0x4d0] sm:$0xff]
    %v252 = vld [vmem:[#allocation2 + $0x4d8] sm:$0xff]
    %v253 = vld [vmem:[#allocation2 + $0x4e0] sm:$0xff]
    %v254 = vld [vmem:[#allocation2 + $0x4e8] sm:$0xff]
    %v255 = vld [vmem:[#allocation2 + $0x4f0] sm:$0xff]
    %v256 = vld [vmem:[#allocation2 + $0x4f8] sm:$0xff]
    %v257 = vld [vmem:[#allocation2 + $0x500] sm:$0xff]
    %v258 = vld [vmem:[#allocation2 + $0x508] sm:$0xff]
    %v259 = vld [vmem:[#allocation2 + $0x510] sm:$0xff]
    %v260 = vld [vmem:[#allocation2 + $0x518] sm:$0xff]
    %v261 = vld [vmem:[#allocation2 + $0x520] sm:$0xff]
    %v262 = vld [vmem:[#allocation2 + $0x528] sm:$0xff]
    %v263 = vld [vmem:[#allocation2 + $0x530] sm:$0xff]
    %v264 = vld [vmem:[#allocation2 + $0x538] sm:$0xff]
    %v265 = vld [vmem:[#allocation2 + $0x540] sm:$0xff]
    %v266 = vld [vmem:[#allocation2 + $0x548] sm:$0xff]
    %v267 = vld [vmem:[#allocation2 + $0x550] sm:$0xff]
    %v268 = vld [vmem:[#allocation2 + $0x558] sm:$0xff]
    %v269 = vld [vmem:[#allocation2 + $0x560] sm:$0xff]
    %v270 = vld [vmem:[#allocation2 + $0x568] sm:$0xff]
    %v271 = vld [vmem:[#allocation2 + $0x570] sm:$0xff]
    %v272 = vld [vmem:[#allocation2 + $0x578] sm:$0xff]
    %v273 = vld [vmem:[#allocation2 + $0x580] sm:$0xff]
    %v274 = vld [vmem:[#allocation2 + $0x588] sm:$0xff]
    %v275 = vld [vmem:[#allocation2 + $0x590] sm:$0xff]
    %v276 = vld [vmem:[#allocation2 + $0x598] sm:$0xff]
    %v277 = vld [vmem:[#allocation2 + $0x5a0] sm:$0xff]
    %v278 = vld [vmem:[#allocation2 + $0x5a8] sm:$0xff]
    %v279 = vld [vmem:[#allocation2 + $0x5b0] sm:$0xff]
    %v280 = vld [vmem:[#allocation2 + $0x5b8] sm:$0xff]
    %v281 = vld [vmem:[#allocation2 + $0x5c0] sm:$0xff]
    %v282 = vld [vmem:[#allocation2 + $0x5c8] sm:$0xff]
    %v283 = vld [vmem:[#allocation2 + $0x5d0] sm:$0xff]
    %v284 = vld [vmem:[#allocation2 + $0x5d8] sm:$0xff]
    %v285 = vld [vmem:[#allocation2 + $0x5e0] sm:$0xff]
    %v286 = vld [vmem:[#allocation2 + $0x5e8] sm:$0xff]
    %v287 = vld [vmem:[#allocation2 + $0x5f0] sm:$0xff]
    %v288 = vld [vmem:[#allocation2 + $0x5f8] sm:$0xff]
    %v289 = vld [vmem:[#allocation2 + $0x600] sm:$0xff]
    %v290 = vld [vmem:[#allocation2 + $0x608] sm:$0xff]
    %v291 = vld [vmem:[#allocation2 + $0x610] sm:$0xff]
    %v292 = vld [vmem:[#allocation2 + $0x618] sm:$0xff]
    %v293 = vld [vmem:[#allocation2 + $0x620] sm:$0xff]
    %v294 = vld [vmem:[#allocation2 + $0x628] sm:$0xff]
    %v295 = vld [vmem:[#allocation2 + $0x630] sm:$0xff]
    %v296 = vld [vmem:[#allocation2 + $0x638] sm:$0xff]
    %v297 = vld [vmem:[#allocation2 + $0x640] sm:$0xff]
    %v298 = vld [vmem:[#allocation2 + $0x648] sm:$0xff]
    %v299 = vld [vmem:[#allocation2 + $0x650] sm:$0xff]
    %v300 = vld [vmem:[#allocation2 + $0x658] sm:$0xff]
    %v301 = vld [vmem:[#allocation2 + $0x660] sm:$0xff]
    %v302 = vld [vmem:[#allocation2 + $0x668] sm:$0xff]
    %v303 = vld [vmem:[#allocation2 + $0x670] sm:$0xff]
    %v304 = vld [vmem:[#allocation2 + $0x678] sm:$0xff]
    %v305 = vld [vmem:[#allocation2 + $0x680] sm:$0xff]
    %v306 = vld [vmem:[#allocation2 + $0x688] sm:$0xff]
    %v307 = vld [vmem:[#allocation2 + $0x690] sm:$0xff]
    %v308 = vld [vmem:[#allocation2 + $0x698] sm:$0xff]
    %v309 = vld [vmem:[#allocation2 + $0x6a0] sm:$0xff]
    %v310 = vld [vmem:[#allocation2 + $0x6a8] sm:$0xff]
    %v311 = vld [vmem:[#allocation2 + $0x6b0] sm:$0xff]
    %v312 = vld [vmem:[#allocation2 + $0x6b8] sm:$0xff]
    %v313 = vld [vmem:[#allocation2 + $0x6c0] sm:$0xff]
    %v314 = vld [vmem:[#allocation2 + $0x6c8] sm:$0xff]
    %v315 = vld [vmem:[#allocation2 + $0x6d0] sm:$0xff]
    %v316 = vld [vmem:[#allocation2 + $0x6d8] sm:$0xff]
    %v317 = vld [vmem:[#allocation2 + $0x6e0] sm:$0xff]
    %v318 = vld [vmem:[#allocation2 + $0x6e8] sm:$0xff]
    %v319 = vld [vmem:[#allocation2 + $0x6f0] sm:$0xff]
    %v320 = vld [vmem:[#allocation2 + $0x6f8] sm:$0xff]
    %v321 = vld [vmem:[#allocation2 + $0x700] sm:$0xff]
    %v322 = vld [vmem:[#allocation2 + $0x708] sm:$0xff]
    %v323 = vld [vmem:[#allocation2 + $0x710] sm:$0xff]
    %v324 = vld [vmem:[#allocation2 + $0x718] sm:$0xff]
    %v325 = vld [vmem:[#allocation2 + $0x720] sm:$0xff]
    %v326 = vld [vmem:[#allocation2 + $0x728] sm:$0xff]
    %v327 = vld [vmem:[#allocation2 + $0x730] sm:$0xff]
    %v328 = vld [vmem:[#allocation2 + $0x738] sm:$0xff]
    %v329 = vld [vmem:[#allocation2 + $0x740] sm:$0xff]
    %v330 = vld [vmem:[#allocation2 + $0x748] sm:$0xff]
    %v331 = vld [vmem:[#allocation2 + $0x750] sm:$0xff]
    %v332 = vld [vmem:[#allocation2 + $0x758] sm:$0xff]
    %v333 = vld [vmem:[#allocation2 + $0x760] sm:$0xff]
    %v334 = vld [vmem:[#allocation2 + $0x768] sm:$0xff]
    %v335 = vld [vmem:[#allocation2 + $0x770] sm:$0xff]
    %v336 = vld [vmem:[#allocation2 + $0x778] sm:$0xff]
    %v337 = vld [vmem:[#allocation2 + $0x780] sm:$0xff]
    %v338 = vld [vmem:[#allocation2 + $0x788] sm:$0xff]
    %v339 = vld [vmem:[#allocation2 + $0x790] sm:$0xff]
    %v340 = vld [vmem:[#allocation2 + $0x798] sm:$0xff]
    %v341 = vld [vmem:[#allocation2 + $0x7a0] sm:$0xff]
    %v342 = vld [vmem:[#allocation2 + $0x7a8] sm:$0xff]
    %v343 = vld [vmem:[#allocation2 + $0x7b0] sm:$0xff]
    %v344 = vld [vmem:[#allocation2 + $0x7b8] sm:$0xff]
    %v345 = vld [vmem:[#allocation2 + $0x7c0] sm:$0xff]
    %v346 = vld [vmem:[#allocation2 + $0x7c8] sm:$0xff]
    %v347 = vld [vmem:[#allocation2 + $0x7d0] sm:$0xff]
    %v348 = vld [vmem:[#allocation2 + $0x7d8] sm:$0xff]
    %v349 = vld [vmem:[#allocation2 + $0x7e0] sm:$0xff]
    %v350 = vld [vmem:[#allocation2 + $0x7e8] sm:$0xff]
    %v351 = vld [vmem:[#allocation2 + $0x7f0] sm:$0xff]
    %v352 = vld [vmem:[#allocation2 + $0x7f8] sm:$0xff]
    %v353 = vld [vmem:[%s2] sm:$0xf]
    %v355 = vperm.slane %v353, 0
    %v356 = vperm.slane %v353, 1
    %v357 = vperm.slane %v353, 2
    %v358 = vperm.slane %v353, 3
    %v619 = vunpack.c.l.b16 %v97
    %v620 = vunpack.c.h.b16 %v97
    %v621 = vunpack.c.l.b16 %v98
    %v622 = vunpack.c.h.b16 %v98
    %v623 = vunpack.c.l.b16 %v99
    %v624 = vunpack.c.h.b16 %v99
    %v625 = vunpack.c.l.b16 %v100
    %v626 = vunpack.c.h.b16 %v100
    %v627 = vunpack.c.l.b16 %v101
    %v628 = vunpack.c.h.b16 %v101
    %v629 = vunpack.c.l.b16 %v102
    %v630 = vunpack.c.h.b16 %v102
    %v631 = vunpack.c.l.b16 %v103
    %v632 = vunpack.c.h.b16 %v103
    %v633 = vunpack.c.l.b16 %v104
    %v634 = vunpack.c.h.b16 %v104
    %v635 = vunpack.c.l.b16 %v105
    %v636 = vunpack.c.h.b16 %v105
    %v637 = vunpack.c.l.b16 %v106
    %v638 = vunpack.c.h.b16 %v106
    %v639 = vunpack.c.l.b16 %v107
    %v640 = vunpack.c.h.b16 %v107
    %v641 = vunpack.c.l.b16 %v108
    %v642 = vunpack.c.h.b16 %v108
    %v643 = vunpack.c.l.b16 %v109
    %v644 = vunpack.c.h.b16 %v109
    %v645 = vunpack.c.l.b16 %v110
    %v646 = vunpack.c.h.b16 %v110
    %v647 = vunpack.c.l.b16 %v111
    %v648 = vunpack.c.h.b16 %v111
    %v649 = vunpack.c.l.b16 %v112
    %v650 = vunpack.c.h.b16 %v112
    %v651 = vunpack.c.l.b16 %v113
    %v652 = vunpack.c.h.b16 %v113
    %v653 = vunpack.c.l.b16 %v114
    %v654 = vunpack.c.h.b16 %v114
    %v655 = vunpack.c.l.b16 %v115
    %v656 = vunpack.c.h.b16 %v115
    %v657 = vunpack.c.l.b16 %v116
    %v658 = vunpack.c.h.b16 %v116
    %v659 = vunpack.c.l.b16 %v117
    %v660 = vunpack.c.h.b16 %v117
    %v661 = vunpack.c.l.b16 %v118
    %v662 = vunpack.c.h.b16 %v118
    %v663 = vunpack.c.l.b16 %v119
    %v664 = vunpack.c.h.b16 %v119
    %v665 = vunpack.c.l.b16 %v120
    %v666 = vunpack.c.h.b16 %v120
    %v667 = vunpack.c.l.b16 %v121
    %v668 = vunpack.c.h.b16 %v121
    %v669 = vunpack.c.l.b16 %v122
    %v670 = vunpack.c.h.b16 %v122
    %v671 = vunpack.c.l.b16 %v123
    %v672 = vunpack.c.h.b16 %v123
    %v673 = vunpack.c.l.b16 %v124
    %v674 = vunpack.c.h.b16 %v124
    %v675 = vunpack.c.l.b16 %v125
    %v676 = vunpack.c.h.b16 %v125
    %v677 = vunpack.c.l.b16 %v126
    %v678 = vunpack.c.h.b16 %v126
    %v679 = vunpack.c.l.b16 %v127
    %v680 = vunpack.c.h.b16 %v127
    %v681 = vunpack.c.l.b16 %v128
    %v682 = vunpack.c.h.b16 %v128
    %v683 = vunpack.c.l.b16 %v129
    %v684 = vunpack.c.h.b16 %v129
    %v685 = vunpack.c.l.b16 %v130
    %v686 = vunpack.c.h.b16 %v130
    %v687 = vunpack.c.l.b16 %v131
    %v688 = vunpack.c.h.b16 %v131
    %v689 = vunpack.c.l.b16 %v132
    %v690 = vunpack.c.h.b16 %v132
    %v691 = vunpack.c.l.b16 %v133
    %v692 = vunpack.c.h.b16 %v133
    %v693 = vunpack.c.l.b16 %v134
    %v694 = vunpack.c.h.b16 %v134
    %v695 = vunpack.c.l.b16 %v135
    %v696 = vunpack.c.h.b16 %v135
    %v697 = vunpack.c.l.b16 %v136
    %v698 = vunpack.c.h.b16 %v136
    %v699 = vunpack.c.l.b16 %v137
    %v700 = vunpack.c.h.b16 %v137
    %v701 = vunpack.c.l.b16 %v138
    %v702 = vunpack.c.h.b16 %v138
    %v703 = vunpack.c.l.b16 %v139
    %v704 = vunpack.c.h.b16 %v139
    %v705 = vunpack.c.l.b16 %v140
    %v706 = vunpack.c.h.b16 %v140
    %v707 = vunpack.c.l.b16 %v141
    %v708 = vunpack.c.h.b16 %v141
    %v709 = vunpack.c.l.b16 %v142
    %v710 = vunpack.c.h.b16 %v142
    %v711 = vunpack.c.l.b16 %v143
    %v712 = vunpack.c.h.b16 %v143
    %v713 = vunpack.c.l.b16 %v144
    %v714 = vunpack.c.h.b16 %v144
    %v715 = vunpack.c.l.b16 %v145
    %v716 = vunpack.c.h.b16 %v145
    %v717 = vunpack.c.l.b16 %v146
    %v718 = vunpack.c.h.b16 %v146
    %v719 = vunpack.c.l.b16 %v147
    %v720 = vunpack.c.h.b16 %v147
    %v721 = vunpack.c.l.b16 %v148
    %v722 = vunpack.c.h.b16 %v148
    %v723 = vunpack.c.l.b16 %v149
    %v724 = vunpack.c.h.b16 %v149
    %v725 = vunpack.c.l.b16 %v150
    %v726 = vunpack.c.h.b16 %v150
    %v727 = vunpack.c.l.b16 %v151
    %v728 = vunpack.c.h.b16 %v151
    %v729 = vunpack.c.l.b16 %v152
    %v730 = vunpack.c.h.b16 %v152
    %v731 = vunpack.c.l.b16 %v153
    %v732 = vunpack.c.h.b16 %v153
    %v733 = vunpack.c.l.b16 %v154
    %v734 = vunpack.c.h.b16 %v154
    %v735 = vunpack.c.l.b16 %v155
    %v736 = vunpack.c.h.b16 %v155
    %v737 = vunpack.c.l.b16 %v156
    %v738 = vunpack.c.h.b16 %v156
    %v739 = vunpack.c.l.b16 %v157
    %v740 = vunpack.c.h.b16 %v157
    %v741 = vunpack.c.l.b16 %v158
    %v742 = vunpack.c.h.b16 %v158
    %v743 = vunpack.c.l.b16 %v159
    %v744 = vunpack.c.h.b16 %v159
    %v745 = vunpack.c.l.b16 %v160
    %v746 = vunpack.c.h.b16 %v160
    %v747 = vunpack.c.l.b16 %v161
    %v748 = vunpack.c.h.b16 %v161
    %v749 = vunpack.c.l.b16 %v162
    %v750 = vunpack.c.h.b16 %v162
    %v751 = vunpack.c.l.b16 %v163
    %v752 = vunpack.c.h.b16 %v163
    %v753 = vunpack.c.l.b16 %v164
    %v754 = vunpack.c.h.b16 %v164
    %v755 = vunpack.c.l.b16 %v165
    %v756 = vunpack.c.h.b16 %v165
    %v757 = vunpack.c.l.b16 %v166
    %v758 = vunpack.c.h.b16 %v166
    %v759 = vunpack.c.l.b16 %v167
    %v760 = vunpack.c.h.b16 %v167
    %v761 = vunpack.c.l.b16 %v168
    %v762 = vunpack.c.h.b16 %v168
    %v763 = vunpack.c.l.b16 %v169
    %v764 = vunpack.c.h.b16 %v169
    %v765 = vunpack.c.l.b16 %v170
    %v766 = vunpack.c.h.b16 %v170
    %v767 = vunpack.c.l.b16 %v171
    %v768 = vunpack.c.h.b16 %v171
    %v769 = vunpack.c.l.b16 %v172
    %v770 = vunpack.c.h.b16 %v172
    %v771 = vunpack.c.l.b16 %v173
    %v772 = vunpack.c.h.b16 %v173
    %v773 = vunpack.c.l.b16 %v174
    %v774 = vunpack.c.h.b16 %v174
    %v775 = vunpack.c.l.b16 %v175
    %v776 = vunpack.c.h.b16 %v175
    %v777 = vunpack.c.l.b16 %v176
    %v778 = vunpack.c.h.b16 %v176
    %v779 = vunpack.c.l.b16 %v177
    %v780 = vunpack.c.h.b16 %v177
    %v781 = vunpack.c.l.b16 %v178
    %v782 = vunpack.c.h.b16 %v178
    %v783 = vunpack.c.l.b16 %v179
    %v784 = vunpack.c.h.b16 %v179
    %v785 = vunpack.c.l.b16 %v180
    %v786 = vunpack.c.h.b16 %v180
    %v787 = vunpack.c.l.b16 %v181
    %v788 = vunpack.c.h.b16 %v181
    %v789 = vunpack.c.l.b16 %v182
    %v790 = vunpack.c.h.b16 %v182
    %v791 = vunpack.c.l.b16 %v183
    %v792 = vunpack.c.h.b16 %v183
    %v793 = vunpack.c.l.b16 %v184
    %v794 = vunpack.c.h.b16 %v184
    %v795 = vunpack.c.l.b16 %v185
    %v796 = vunpack.c.h.b16 %v185
    %v797 = vunpack.c.l.b16 %v186
    %v798 = vunpack.c.h.b16 %v186
    %v799 = vunpack.c.l.b16 %v187
    %v800 = vunpack.c.h.b16 %v187
    %v801 = vunpack.c.l.b16 %v188
    %v802 = vunpack.c.h.b16 %v188
    %v803 = vunpack.c.l.b16 %v189
    %v804 = vunpack.c.h.b16 %v189
    %v805 = vunpack.c.l.b16 %v190
    %v806 = vunpack.c.h.b16 %v190
    %v807 = vunpack.c.l.b16 %v191
    %v808 = vunpack.c.h.b16 %v191
    %v809 = vunpack.c.l.b16 %v192
    %v810 = vunpack.c.h.b16 %v192
    %v811 = vunpack.c.l.b16 %v193
    %v812 = vunpack.c.h.b16 %v193
    %v813 = vunpack.c.l.b16 %v194
    %v814 = vunpack.c.h.b16 %v194
    %v815 = vunpack.c.l.b16 %v195
    %v816 = vunpack.c.h.b16 %v195
    %v817 = vunpack.c.l.b16 %v196
    %v818 = vunpack.c.h.b16 %v196
    %v819 = vunpack.c.l.b16 %v197
    %v820 = vunpack.c.h.b16 %v197
    %v821 = vunpack.c.l.b16 %v198
    %v822 = vunpack.c.h.b16 %v198
    %v823 = vunpack.c.l.b16 %v199
    %v824 = vunpack.c.h.b16 %v199
    %v825 = vunpack.c.l.b16 %v200
    %v826 = vunpack.c.h.b16 %v200
    %v827 = vunpack.c.l.b16 %v201
    %v828 = vunpack.c.h.b16 %v201
    %v829 = vunpack.c.l.b16 %v202
    %v830 = vunpack.c.h.b16 %v202
    %v831 = vunpack.c.l.b16 %v203
    %v832 = vunpack.c.h.b16 %v203
    %v833 = vunpack.c.l.b16 %v204
    %v834 = vunpack.c.h.b16 %v204
    %v835 = vunpack.c.l.b16 %v205
    %v836 = vunpack.c.h.b16 %v205
    %v837 = vunpack.c.l.b16 %v206
    %v838 = vunpack.c.h.b16 %v206
    %v839 = vunpack.c.l.b16 %v207
    %v840 = vunpack.c.h.b16 %v207
    %v841 = vunpack.c.l.b16 %v208
    %v842 = vunpack.c.h.b16 %v208
    %v843 = vunpack.c.l.b16 %v209
    %v844 = vunpack.c.h.b16 %v209
    %v845 = vunpack.c.l.b16 %v210
    %v846 = vunpack.c.h.b16 %v210
    %v847 = vunpack.c.l.b16 %v211
    %v848 = vunpack.c.h.b16 %v211
    %v849 = vunpack.c.l.b16 %v212
    %v850 = vunpack.c.h.b16 %v212
    %v851 = vunpack.c.l.b16 %v213
    %v852 = vunpack.c.h.b16 %v213
    %v853 = vunpack.c.l.b16 %v214
    %v854 = vunpack.c.h.b16 %v214
    %v855 = vunpack.c.l.b16 %v215
    %v856 = vunpack.c.h.b16 %v215
    %v857 = vunpack.c.l.b16 %v216
    %v858 = vunpack.c.h.b16 %v216
    %v859 = vunpack.c.l.b16 %v217
    %v860 = vunpack.c.h.b16 %v217
    %v861 = vunpack.c.l.b16 %v218
    %v862 = vunpack.c.h.b16 %v218
    %v863 = vunpack.c.l.b16 %v219
    %v864 = vunpack.c.h.b16 %v219
    %v865 = vunpack.c.l.b16 %v220
    %v866 = vunpack.c.h.b16 %v220
    %v867 = vunpack.c.l.b16 %v221
    %v868 = vunpack.c.h.b16 %v221
    %v869 = vunpack.c.l.b16 %v222
    %v870 = vunpack.c.h.b16 %v222
    %v871 = vunpack.c.l.b16 %v223
    %v872 = vunpack.c.h.b16 %v223
    %v873 = vunpack.c.l.b16 %v224
    %v874 = vunpack.c.h.b16 %v224
    %v875 = vunpack.c.l.b16 %v225
    %v876 = vunpack.c.h.b16 %v225
    %v877 = vunpack.c.l.b16 %v226
    %v878 = vunpack.c.h.b16 %v226
    %v879 = vunpack.c.l.b16 %v227
    %v880 = vunpack.c.h.b16 %v227
    %v881 = vunpack.c.l.b16 %v228
    %v882 = vunpack.c.h.b16 %v228
    %v883 = vunpack.c.l.b16 %v229
    %v884 = vunpack.c.h.b16 %v229
    %v885 = vunpack.c.l.b16 %v230
    %v886 = vunpack.c.h.b16 %v230
    %v887 = vunpack.c.l.b16 %v231
    %v888 = vunpack.c.h.b16 %v231
    %v889 = vunpack.c.l.b16 %v232
    %v890 = vunpack.c.h.b16 %v232
    %v891 = vunpack.c.l.b16 %v233
    %v892 = vunpack.c.h.b16 %v233
    %v893 = vunpack.c.l.b16 %v234
    %v894 = vunpack.c.h.b16 %v234
    %v895 = vunpack.c.l.b16 %v235
    %v896 = vunpack.c.h.b16 %v235
    %v897 = vunpack.c.l.b16 %v236
    %v898 = vunpack.c.h.b16 %v236
    %v899 = vunpack.c.l.b16 %v237
    %v900 = vunpack.c.h.b16 %v237
    %v901 = vunpack.c.l.b16 %v238
    %v902 = vunpack.c.h.b16 %v238
    %v903 = vunpack.c.l.b16 %v239
    %v904 = vunpack.c.h.b16 %v239
    %v905 = vunpack.c.l.b16 %v240
    %v906 = vunpack.c.h.b16 %v240
    %v907 = vunpack.c.l.b16 %v241
    %v908 = vunpack.c.h.b16 %v241
    %v909 = vunpack.c.l.b16 %v242
    %v910 = vunpack.c.h.b16 %v242
    %v911 = vunpack.c.l.b16 %v243
    %v912 = vunpack.c.h.b16 %v243
    %v913 = vunpack.c.l.b16 %v244
    %v914 = vunpack.c.h.b16 %v244
    %v915 = vunpack.c.l.b16 %v245
    %v916 = vunpack.c.h.b16 %v245
    %v917 = vunpack.c.l.b16 %v246
    %v918 = vunpack.c.h.b16 %v246
    %v919 = vunpack.c.l.b16 %v247
    %v920 = vunpack.c.h.b16 %v247
    %v921 = vunpack.c.l.b16 %v248
    %v922 = vunpack.c.h.b16 %v248
    %v923 = vunpack.c.l.b16 %v249
    %v924 = vunpack.c.h.b16 %v249
    %v925 = vunpack.c.l.b16 %v250
    %v926 = vunpack.c.h.b16 %v250
    %v927 = vunpack.c.l.b16 %v251
    %v928 = vunpack.c.h.b16 %v251
    %v929 = vunpack.c.l.b16 %v252
    %v930 = vunpack.c.h.b16 %v252
    %v931 = vunpack.c.l.b16 %v253
    %v932 = vunpack.c.h.b16 %v253
    %v933 = vunpack.c.l.b16 %v254
    %v934 = vunpack.c.h.b16 %v254
    %v935 = vunpack.c.l.b16 %v255
    %v936 = vunpack.c.h.b16 %v255
    %v937 = vunpack.c.l.b16 %v256
    %v938 = vunpack.c.h.b16 %v256
    %v939 = vunpack.c.l.b16 %v257
    %v940 = vunpack.c.h.b16 %v257
    %v941 = vunpack.c.l.b16 %v258
    %v942 = vunpack.c.h.b16 %v258
    %v943 = vunpack.c.l.b16 %v259
    %v944 = vunpack.c.h.b16 %v259
    %v945 = vunpack.c.l.b16 %v260
    %v946 = vunpack.c.h.b16 %v260
    %v947 = vunpack.c.l.b16 %v261
    %v948 = vunpack.c.h.b16 %v261
    %v949 = vunpack.c.l.b16 %v262
    %v950 = vunpack.c.h.b16 %v262
    %v951 = vunpack.c.l.b16 %v263
    %v952 = vunpack.c.h.b16 %v263
    %v953 = vunpack.c.l.b16 %v264
    %v954 = vunpack.c.h.b16 %v264
    %v955 = vunpack.c.l.b16 %v265
    %v956 = vunpack.c.h.b16 %v265
    %v957 = vunpack.c.l.b16 %v266
    %v958 = vunpack.c.h.b16 %v266
    %v959 = vunpack.c.l.b16 %v267
    %v960 = vunpack.c.h.b16 %v267
    %v961 = vunpack.c.l.b16 %v268
    %v962 = vunpack.c.h.b16 %v268
    %v963 = vunpack.c.l.b16 %v269
    %v964 = vunpack.c.h.b16 %v269
    %v965 = vunpack.c.l.b16 %v270
    %v966 = vunpack.c.h.b16 %v270
    %v967 = vunpack.c.l.b16 %v271
    %v968 = vunpack.c.h.b16 %v271
    %v969 = vunpack.c.l.b16 %v272
    %v970 = vunpack.c.h.b16 %v272
    %v971 = vunpack.c.l.b16 %v273
    %v972 = vunpack.c.h.b16 %v273
    %v973 = vunpack.c.l.b16 %v274
    %v974 = vunpack.c.h.b16 %v274
    %v975 = vunpack.c.l.b16 %v275
    %v976 = vunpack.c.h.b16 %v275
    %v977 = vunpack.c.l.b16 %v276
    %v978 = vunpack.c.h.b16 %v276
    %v979 = vunpack.c.l.b16 %v277
    %v980 = vunpack.c.h.b16 %v277
    %v981 = vunpack.c.l.b16 %v278
    %v982 = vunpack.c.h.b16 %v278
    %v983 = vunpack.c.l.b16 %v279
    %v984 = vunpack.c.h.b16 %v279
    %v985 = vunpack.c.l.b16 %v280
    %v986 = vunpack.c.h.b16 %v280
    %v987 = vunpack.c.l.b16 %v281
    %v988 = vunpack.c.h.b16 %v281
    %v989 = vunpack.c.l.b16 %v282
    %v990 = vunpack.c.h.b16 %v282
    %v991 = vunpack.c.l.b16 %v283
    %v992 = vunpack.c.h.b16 %v283
    %v993 = vunpack.c.l.b16 %v284
    %v994 = vunpack.c.h.b16 %v284
    %v995 = vunpack.c.l.b16 %v285
    %v996 = vunpack.c.h.b16 %v285
    %v997 = vunpack.c.l.b16 %v286
    %v998 = vunpack.c.h.b16 %v286
    %v999 = vunpack.c.l.b16 %v287
    %v1000 = vunpack.c.h.b16 %v287
    %v1001 = vunpack.c.l.b16 %v288
    %v1002 = vunpack.c.h.b16 %v288
    %v1003 = vunpack.c.l.b16 %v289
    %v1004 = vunpack.c.h.b16 %v289
    %v1005 = vunpack.c.l.b16 %v290
    %v1006 = vunpack.c.h.b16 %v290
    %v1007 = vunpack.c.l.b16 %v291
    %v1008 = vunpack.c.h.b16 %v291
    %v1009 = vunpack.c.l.b16 %v292
    %v1010 = vunpack.c.h.b16 %v292
    %v1011 = vunpack.c.l.b16 %v293
    %v1012 = vunpack.c.h.b16 %v293
    %v1013 = vunpack.c.l.b16 %v294
    %v1014 = vunpack.c.h.b16 %v294
    %v1015 = vunpack.c.l.b16 %v295
    %v1016 = vunpack.c.h.b16 %v295
    %v1017 = vunpack.c.l.b16 %v296
    %v1018 = vunpack.c.h.b16 %v296
    %v1019 = vunpack.c.l.b16 %v297
    %v1020 = vunpack.c.h.b16 %v297
    %v1021 = vunpack.c.l.b16 %v298
    %v1022 = vunpack.c.h.b16 %v298
    %v1023 = vunpack.c.l.b16 %v299
    %v1024 = vunpack.c.h.b16 %v299
    %v1025 = vunpack.c.l.b16 %v300
    %v1026 = vunpack.c.h.b16 %v300
    %v1027 = vunpack.c.l.b16 %v301
    %v1028 = vunpack.c.h.b16 %v301
    %v1029 = vunpack.c.l.b16 %v302
    %v1030 = vunpack.c.h.b16 %v302
    %v1031 = vunpack.c.l.b16 %v303
    %v1032 = vunpack.c.h.b16 %v303
    %v1033 = vunpack.c.l.b16 %v304
    %v1034 = vunpack.c.h.b16 %v304
    %v1035 = vunpack.c.l.b16 %v305
    %v1036 = vunpack.c.h.b16 %v305
    %v1037 = vunpack.c.l.b16 %v306
    %v1038 = vunpack.c.h.b16 %v306
    %v1039 = vunpack.c.l.b16 %v307
    %v1040 = vunpack.c.h.b16 %v307
    %v1041 = vunpack.c.l.b16 %v308
    %v1042 = vunpack.c.h.b16 %v308
    %v1043 = vunpack.c.l.b16 %v309
    %v1044 = vunpack.c.h.b16 %v309
    %v1045 = vunpack.c.l.b16 %v310
    %v1046 = vunpack.c.h.b16 %v310
    %v1047 = vunpack.c.l.b16 %v311
    %v1048 = vunpack.c.h.b16 %v311
    %v1049 = vunpack.c.l.b16 %v312
    %v1050 = vunpack.c.h.b16 %v312
    %v1051 = vunpack.c.l.b16 %v313
    %v1052 = vunpack.c.h.b16 %v313
    %v1053 = vunpack.c.l.b16 %v314
    %v1054 = vunpack.c.h.b16 %v314
    %v1055 = vunpack.c.l.b16 %v315
    %v1056 = vunpack.c.h.b16 %v315
    %v1057 = vunpack.c.l.b16 %v316
    %v1058 = vunpack.c.h.b16 %v316
    %v1059 = vunpack.c.l.b16 %v317
    %v1060 = vunpack.c.h.b16 %v317
    %v1061 = vunpack.c.l.b16 %v318
    %v1062 = vunpack.c.h.b16 %v318
    %v1063 = vunpack.c.l.b16 %v319
    %v1064 = vunpack.c.h.b16 %v319
    %v1065 = vunpack.c.l.b16 %v320
    %v1066 = vunpack.c.h.b16 %v320
    %v1067 = vunpack.c.l.b16 %v321
    %v1068 = vunpack.c.h.b16 %v321
    %v1069 = vunpack.c.l.b16 %v322
    %v1070 = vunpack.c.h.b16 %v322
    %v1071 = vunpack.c.l.b16 %v323
    %v1072 = vunpack.c.h.b16 %v323
    %v1073 = vunpack.c.l.b16 %v324
    %v1074 = vunpack.c.h.b16 %v324
    %v1075 = vunpack.c.l.b16 %v325
    %v1076 = vunpack.c.h.b16 %v325
    %v1077 = vunpack.c.l.b16 %v326
    %v1078 = vunpack.c.h.b16 %v326
    %v1079 = vunpack.c.l.b16 %v327
    %v1080 = vunpack.c.h.b16 %v327
    %v1081 = vunpack.c.l.b16 %v328
    %v1082 = vunpack.c.h.b16 %v328
    %v1083 = vunpack.c.l.b16 %v329
    %v1084 = vunpack.c.h.b16 %v329
    %v1085 = vunpack.c.l.b16 %v330
    %v1086 = vunpack.c.h.b16 %v330
    %v1087 = vunpack.c.l.b16 %v331
    %v1088 = vunpack.c.h.b16 %v331
    %v1089 = vunpack.c.l.b16 %v332
    %v1090 = vunpack.c.h.b16 %v332
    %v1091 = vunpack.c.l.b16 %v333
    %v1092 = vunpack.c.h.b16 %v333
    %v1093 = vunpack.c.l.b16 %v334
    %v1094 = vunpack.c.h.b16 %v334
    %v1095 = vunpack.c.l.b16 %v335
    %v1096 = vunpack.c.h.b16 %v335
    %v1097 = vunpack.c.l.b16 %v336
    %v1098 = vunpack.c.h.b16 %v336
    %v1099 = vunpack.c.l.b16 %v337
    %v1100 = vunpack.c.h.b16 %v337
    %v1101 = vunpack.c.l.b16 %v338
    %v1102 = vunpack.c.h.b16 %v338
    %v1103 = vunpack.c.l.b16 %v339
    %v1104 = vunpack.c.h.b16 %v339
    %v1105 = vunpack.c.l.b16 %v340
    %v1106 = vunpack.c.h.b16 %v340
    %v1107 = vunpack.c.l.b16 %v341
    %v1108 = vunpack.c.h.b16 %v341
    %v1109 = vunpack.c.l.b16 %v342
    %v1110 = vunpack.c.h.b16 %v342
    %v1111 = vunpack.c.l.b16 %v343
    %v1112 = vunpack.c.h.b16 %v343
    %v1113 = vunpack.c.l.b16 %v344
    %v1114 = vunpack.c.h.b16 %v344
    %v1115 = vunpack.c.l.b16 %v345
    %v1116 = vunpack.c.h.b16 %v345
    %v1117 = vunpack.c.l.b16 %v346
    %v1118 = vunpack.c.h.b16 %v346
    %v1119 = vunpack.c.l.b16 %v347
    %v1120 = vunpack.c.h.b16 %v347
    %v1121 = vunpack.c.l.b16 %v348
    %v1122 = vunpack.c.h.b16 %v348
    %v1123 = vunpack.c.l.b16 %v349
    %v1124 = vunpack.c.h.b16 %v349
    %v1125 = vunpack.c.l.b16 %v350
    %v1126 = vunpack.c.h.b16 %v350
    %v1127 = vunpack.c.l.b16 %v351
    %v1128 = vunpack.c.h.b16 %v351
    %v1129 = vunpack.c.l.b16 %v352
    %v1130 = vunpack.c.h.b16 %v352
    %v1131 = vpack.c.b16 %v623, %v619
    %v1132 = vpack.c.b16 %v624, %v620
    %v1133 = vpack.c.b16 %v625, %v621
    %v1134 = vpack.c.b16 %v626, %v622
    %v1135 = vpack.c.b16 %v631, %v627
    %v1136 = vpack.c.b16 %v632, %v628
    %v1137 = vpack.c.b16 %v633, %v629
    %v1138 = vpack.c.b16 %v634, %v630
    %v1139 = vpack.c.b16 %v639, %v635
    %v1140 = vpack.c.b16 %v640, %v636
    %v1141 = vpack.c.b16 %v641, %v637
    %v1142 = vpack.c.b16 %v642, %v638
    %v1143 = vpack.c.b16 %v647, %v643
    %v1144 = vpack.c.b16 %v648, %v644
    %v1145 = vpack.c.b16 %v649, %v645
    %v1146 = vpack.c.b16 %v650, %v646
    %v1147 = vpack.c.b16 %v655, %v651
    %v1148 = vpack.c.b16 %v656, %v652
    %v1149 = vpack.c.b16 %v657, %v653
    %v1150 = vpack.c.b16 %v658, %v654
    %v1151 = vpack.c.b16 %v663, %v659
    %v1152 = vpack.c.b16 %v664, %v660
    %v1153 = vpack.c.b16 %v665, %v661
    %v1154 = vpack.c.b16 %v666, %v662
    %v1155 = vpack.c.b16 %v671, %v667
    %v1156 = vpack.c.b16 %v672, %v668
    %v1157 = vpack.c.b16 %v673, %v669
    %v1158 = vpack.c.b16 %v674, %v670
    %v1159 = vpack.c.b16 %v679, %v675
    %v1160 = vpack.c.b16 %v680, %v676
    %v1161 = vpack.c.b16 %v681, %v677
    %v1162 = vpack.c.b16 %v682, %v678
    %v1163 = vpack.c.b16 %v687, %v683
    %v1164 = vpack.c.b16 %v688, %v684
    %v1165 = vpack.c.b16 %v689, %v685
    %v1166 = vpack.c.b16 %v690, %v686
    %v1167 = vpack.c.b16 %v695, %v691
    %v1168 = vpack.c.b16 %v696, %v692
    %v1169 = vpack.c.b16 %v697, %v693
    %v1170 = vpack.c.b16 %v698, %v694
    %v1171 = vpack.c.b16 %v703, %v699
    %v1172 = vpack.c.b16 %v704, %v700
    %v1173 = vpack.c.b16 %v705, %v701
    %v1174 = vpack.c.b16 %v706, %v702
    %v1175 = vpack.c.b16 %v711, %v707
    %v1176 = vpack.c.b16 %v712, %v708
    %v1177 = vpack.c.b16 %v713, %v709
    %v1178 = vpack.c.b16 %v714, %v710
    %v1179 = vpack.c.b16 %v719, %v715
    %v1180 = vpack.c.b16 %v720, %v716
    %v1181 = vpack.c.b16 %v721, %v717
    %v1182 = vpack.c.b16 %v722, %v718
    %v1183 = vpack.c.b16 %v727, %v723
    %v1184 = vpack.c.b16 %v728, %v724
    %v1185 = vpack.c.b16 %v729, %v725
    %v1186 = vpack.c.b16 %v730, %v726
    %v1187 = vpack.c.b16 %v735, %v731
    %v1188 = vpack.c.b16 %v736, %v732
    %v1189 = vpack.c.b16 %v737, %v733
    %v1190 = vpack.c.b16 %v738, %v734
    %v1191 = vpack.c.b16 %v743, %v739
    %v1192 = vpack.c.b16 %v744, %v740
    %v1193 = vpack.c.b16 %v745, %v741
    %v1194 = vpack.c.b16 %v746, %v742
    %v1195 = vpack.c.b16 %v751, %v747
    %v1196 = vpack.c.b16 %v752, %v748
    %v1197 = vpack.c.b16 %v753, %v749
    %v1198 = vpack.c.b16 %v754, %v750
    %v1199 = vpack.c.b16 %v759, %v755
    %v1200 = vpack.c.b16 %v760, %v756
    %v1201 = vpack.c.b16 %v761, %v757
    %v1202 = vpack.c.b16 %v762, %v758
    %v1203 = vpack.c.b16 %v767, %v763
    %v1204 = vpack.c.b16 %v768, %v764
    %v1205 = vpack.c.b16 %v769, %v765
    %v1206 = vpack.c.b16 %v770, %v766
    %v1207 = vpack.c.b16 %v775, %v771
    %v1208 = vpack.c.b16 %v776, %v772
    %v1209 = vpack.c.b16 %v777, %v773
    %v1210 = vpack.c.b16 %v778, %v774
    %v1211 = vpack.c.b16 %v783, %v779
    %v1212 = vpack.c.b16 %v784, %v780
    %v1213 = vpack.c.b16 %v785, %v781
    %v1214 = vpack.c.b16 %v786, %v782
    %v1215 = vpack.c.b16 %v791, %v787
    %v1216 = vpack.c.b16 %v792, %v788
    %v1217 = vpack.c.b16 %v793, %v789
    %v1218 = vpack.c.b16 %v794, %v790
    %v1219 = vpack.c.b16 %v799, %v795
    %v1220 = vpack.c.b16 %v800, %v796
    %v1221 = vpack.c.b16 %v801, %v797
    %v1222 = vpack.c.b16 %v802, %v798
    %v1223 = vpack.c.b16 %v807, %v803
    %v1224 = vpack.c.b16 %v808, %v804
    %v1225 = vpack.c.b16 %v809, %v805
    %v1226 = vpack.c.b16 %v810, %v806
    %v1227 = vpack.c.b16 %v815, %v811
    %v1228 = vpack.c.b16 %v816, %v812
    %v1229 = vpack.c.b16 %v817, %v813
    %v1230 = vpack.c.b16 %v818, %v814
    %v1231 = vpack.c.b16 %v823, %v819
    %v1232 = vpack.c.b16 %v824, %v820
    %v1233 = vpack.c.b16 %v825, %v821
    %v1234 = vpack.c.b16 %v826, %v822
    %v1235 = vpack.c.b16 %v831, %v827
    %v1236 = vpack.c.b16 %v832, %v828
    %v1237 = vpack.c.b16 %v833, %v829
    %v1238 = vpack.c.b16 %v834, %v830
    %v1239 = vpack.c.b16 %v839, %v835
    %v1240 = vpack.c.b16 %v840, %v836
    %v1241 = vpack.c.b16 %v841, %v837
    %v1242 = vpack.c.b16 %v842, %v838
    %v1243 = vpack.c.b16 %v847, %v843
    %v1244 = vpack.c.b16 %v848, %v844
    %v1245 = vpack.c.b16 %v849, %v845
    %v1246 = vpack.c.b16 %v850, %v846
    %v1247 = vpack.c.b16 %v855, %v851
    %v1248 = vpack.c.b16 %v856, %v852
    %v1249 = vpack.c.b16 %v857, %v853
    %v1250 = vpack.c.b16 %v858, %v854
    %v1251 = vpack.c.b16 %v863, %v859
    %v1252 = vpack.c.b16 %v864, %v860
    %v1253 = vpack.c.b16 %v865, %v861
    %v1254 = vpack.c.b16 %v866, %v862
    %v1255 = vpack.c.b16 %v871, %v867
    %v1256 = vpack.c.b16 %v872, %v868
    %v1257 = vpack.c.b16 %v873, %v869
    %v1258 = vpack.c.b16 %v874, %v870
    %v1259 = vpack.c.b16 %v879, %v875
    %v1260 = vpack.c.b16 %v880, %v876
    %v1261 = vpack.c.b16 %v881, %v877
    %v1262 = vpack.c.b16 %v882, %v878
    %v1263 = vpack.c.b16 %v887, %v883
    %v1264 = vpack.c.b16 %v888, %v884
    %v1265 = vpack.c.b16 %v889, %v885
    %v1266 = vpack.c.b16 %v890, %v886
    %v1267 = vpack.c.b16 %v895, %v891
    %v1268 = vpack.c.b16 %v896, %v892
    %v1269 = vpack.c.b16 %v897, %v893
    %v1270 = vpack.c.b16 %v898, %v894
    %v1271 = vpack.c.b16 %v903, %v899
    %v1272 = vpack.c.b16 %v904, %v900
    %v1273 = vpack.c.b16 %v905, %v901
    %v1274 = vpack.c.b16 %v906, %v902
    %v1275 = vpack.c.b16 %v911, %v907
    %v1276 = vpack.c.b16 %v912, %v908
    %v1277 = vpack.c.b16 %v913, %v909
    %v1278 = vpack.c.b16 %v914, %v910
    %v1279 = vpack.c.b16 %v919, %v915
    %v1280 = vpack.c.b16 %v920, %v916
    %v1281 = vpack.c.b16 %v921, %v917
    %v1282 = vpack.c.b16 %v922, %v918
    %v1283 = vpack.c.b16 %v927, %v923
    %v1284 = vpack.c.b16 %v928, %v924
    %v1285 = vpack.c.b16 %v929, %v925
    %v1286 = vpack.c.b16 %v930, %v926
    %v1287 = vpack.c.b16 %v935, %v931
    %v1288 = vpack.c.b16 %v936, %v932
    %v1289 = vpack.c.b16 %v937, %v933
    %v1290 = vpack.c.b16 %v938, %v934
    %v1291 = vpack.c.b16 %v943, %v939
    %v1292 = vpack.c.b16 %v944, %v940
    %v1293 = vpack.c.b16 %v945, %v941
    %v1294 = vpack.c.b16 %v946, %v942
    %v1295 = vpack.c.b16 %v951, %v947
    %v1296 = vpack.c.b16 %v952, %v948
    %v1297 = vpack.c.b16 %v953, %v949
    %v1298 = vpack.c.b16 %v954, %v950
    %v1299 = vpack.c.b16 %v959, %v955
    %v1300 = vpack.c.b16 %v960, %v956
    %v1301 = vpack.c.b16 %v961, %v957
    %v1302 = vpack.c.b16 %v962, %v958
    %v1303 = vpack.c.b16 %v967, %v963
    %v1304 = vpack.c.b16 %v968, %v964
    %v1305 = vpack.c.b16 %v969, %v965
    %v1306 = vpack.c.b16 %v970, %v966
    %v1307 = vpack.c.b16 %v975, %v971
    %v1308 = vpack.c.b16 %v976, %v972
    %v1309 = vpack.c.b16 %v977, %v973
    %v1310 = vpack.c.b16 %v978, %v974
    %v1311 = vpack.c.b16 %v983, %v979
    %v1312 = vpack.c.b16 %v984, %v980
    %v1313 = vpack.c.b16 %v985, %v981
    %v1314 = vpack.c.b16 %v986, %v982
    %v1315 = vpack.c.b16 %v991, %v987
    %v1316 = vpack.c.b16 %v992, %v988
    %v1317 = vpack.c.b16 %v993, %v989
    %v1318 = vpack.c.b16 %v994, %v990
    %v1319 = vpack.c.b16 %v999, %v995
    %v1320 = vpack.c.b16 %v1000, %v996
    %v1321 = vpack.c.b16 %v1001, %v997
    %v1322 = vpack.c.b16 %v1002, %v998
    %v1323 = vpack.c.b16 %v1007, %v1003
    %v1324 = vpack.c.b16 %v1008, %v1004
    %v1325 = vpack.c.b16 %v1009, %v1005
    %v1326 = vpack.c.b16 %v1010, %v1006
    %v1327 = vpack.c.b16 %v1015, %v1011
    %v1328 = vpack.c.b16 %v1016, %v1012
    %v1329 = vpack.c.b16 %v1017, %v1013
    %v1330 = vpack.c.b16 %v1018, %v1014
    %v1331 = vpack.c.b16 %v1023, %v1019
    %v1332 = vpack.c.b16 %v1024, %v1020
    %v1333 = vpack.c.b16 %v1025, %v1021
    %v1334 = vpack.c.b16 %v1026, %v1022
    %v1335 = vpack.c.b16 %v1031, %v1027
    %v1336 = vpack.c.b16 %v1032, %v1028
    %v1337 = vpack.c.b16 %v1033, %v1029
    %v1338 = vpack.c.b16 %v1034, %v1030
    %v1339 = vpack.c.b16 %v1039, %v1035
    %v1340 = vpack.c.b16 %v1040, %v1036
    %v1341 = vpack.c.b16 %v1041, %v1037
    %v1342 = vpack.c.b16 %v1042, %v1038
    %v1343 = vpack.c.b16 %v1047, %v1043
    %v1344 = vpack.c.b16 %v1048, %v1044
    %v1345 = vpack.c.b16 %v1049, %v1045
    %v1346 = vpack.c.b16 %v1050, %v1046
    %v1347 = vpack.c.b16 %v1055, %v1051
    %v1348 = vpack.c.b16 %v1056, %v1052
    %v1349 = vpack.c.b16 %v1057, %v1053
    %v1350 = vpack.c.b16 %v1058, %v1054
    %v1351 = vpack.c.b16 %v1063, %v1059
    %v1352 = vpack.c.b16 %v1064, %v1060
    %v1353 = vpack.c.b16 %v1065, %v1061
    %v1354 = vpack.c.b16 %v1066, %v1062
    %v1355 = vpack.c.b16 %v1071, %v1067
    %v1356 = vpack.c.b16 %v1072, %v1068
    %v1357 = vpack.c.b16 %v1073, %v1069
    %v1358 = vpack.c.b16 %v1074, %v1070
    %v1359 = vpack.c.b16 %v1079, %v1075
    %v1360 = vpack.c.b16 %v1080, %v1076
    %v1361 = vpack.c.b16 %v1081, %v1077
    %v1362 = vpack.c.b16 %v1082, %v1078
    %v1363 = vpack.c.b16 %v1087, %v1083
    %v1364 = vpack.c.b16 %v1088, %v1084
    %v1365 = vpack.c.b16 %v1089, %v1085
    %v1366 = vpack.c.b16 %v1090, %v1086
    %v1367 = vpack.c.b16 %v1095, %v1091
    %v1368 = vpack.c.b16 %v1096, %v1092
    %v1369 = vpack.c.b16 %v1097, %v1093
    %v1370 = vpack.c.b16 %v1098, %v1094
    %v1371 = vpack.c.b16 %v1103, %v1099
    %v1372 = vpack.c.b16 %v1104, %v1100
    %v1373 = vpack.c.b16 %v1105, %v1101
    %v1374 = vpack.c.b16 %v1106, %v1102
    %v1375 = vpack.c.b16 %v1111, %v1107
    %v1376 = vpack.c.b16 %v1112, %v1108
    %v1377 = vpack.c.b16 %v1113, %v1109
    %v1378 = vpack.c.b16 %v1114, %v1110
    %v1379 = vpack.c.b16 %v1119, %v1115
    %v1380 = vpack.c.b16 %v1120, %v1116
    %v1381 = vpack.c.b16 %v1121, %v1117
    %v1382 = vpack.c.b16 %v1122, %v1118
    %v1383 = vpack.c.b16 %v1127, %v1123
    %v1384 = vpack.c.b16 %v1128, %v1124
    %v1385 = vpack.c.b16 %v1129, %v1125
    %v1386 = vpack.c.b16 %v1130, %v1126
    %1643 = vmatpush.bf16.msra.mxu0 %v1159
    %1644 = vmatpush.bf16.msra.mxu0 %v1155
    %1645 = vmatpush.bf16.msra.mxu0 %v1151
    %1646 = vmatpush.bf16.msra.mxu0 %v1147
    %1647 = vmatpush.bf16.msra.mxu0 %v1143
    %1648 = vmatpush.bf16.msra.mxu0 %v1139
    %1649 = vmatpush.bf16.msra.mxu0 %v1135
    %1650 = vmatpush.bf16.msra.mxu0 %v1131
    %1651 = vmatmul.bf16.gmra.mxu0 %v89
    %v1652 = vpop.f32.mrf.mxu0
    %v1653 = vadd.f32 %v355, %v1652
    %v1654 = vpop.f32.mrf.mxu0
    %1655 = vdwg.mxu0
    %1656 = vmatpush.bf16.msra.mxu0 %v1191
    %1657 = vmatpush.bf16.msra.mxu0 %v1187
    %1658 = vmatpush.bf16.msra.mxu0 %v1183
    %1659 = vmatpush.bf16.msra.mxu0 %v1179
    %1660 = vmatpush.bf16.msra.mxu0 %v1175
    %1661 = vmatpush.bf16.msra.mxu0 %v1171
    %1662 = vmatpush.bf16.msra.mxu0 %v1167
    %1663 = vmatpush.bf16.msra.mxu0 %v1163
    %1664 = vmatmul.bf16.gmra.mxu0 %v90
    %v1665 = vpop.f32.mrf.mxu0
    %v1666 = vadd.f32 %v1653, %v1665
    %v1667 = vpop.f32.mrf.mxu0
    %1668 = vdwg.mxu0
    %1669 = vmatpush.bf16.msra.mxu0 %v1223
    %1670 = vmatpush.bf16.msra.mxu0 %v1219
    %1671 = vmatpush.bf16.msra.mxu0 %v1215
    %1672 = vmatpush.bf16.msra.mxu0 %v1211
    %1673 = vmatpush.bf16.msra.mxu0 %v1207
    %1674 = vmatpush.bf16.msra.mxu0 %v1203
    %1675 = vmatpush.bf16.msra.mxu0 %v1199
    %1676 = vmatpush.bf16.msra.mxu0 %v1195
    %1677 = vmatmul.bf16.gmra.mxu0 %v91
    %v1678 = vpop.f32.mrf.mxu0
    %v1679 = vadd.f32 %v1666, %v1678
    %v1680 = vpop.f32.mrf.mxu0
    %1681 = vdwg.mxu0
    %1682 = vmatpush.bf16.msra.mxu0 %v1255
    %1683 = vmatpush.bf16.msra.mxu0 %v1251
    %1684 = vmatpush.bf16.msra.mxu0 %v1247
    %1685 = vmatpush.bf16.msra.mxu0 %v1243
    %1686 = vmatpush.bf16.msra.mxu0 %v1239
    %1687 = vmatpush.bf16.msra.mxu0 %v1235
    %1688 = vmatpush.bf16.msra.mxu0 %v1231
    %1689 = vmatpush.bf16.msra.mxu0 %v1227
    %1690 = vmatmul.bf16.gmra.mxu0 %v92
    %v1691 = vpop.f32.mrf.mxu0
    %v1692 = vadd.f32 %v1679, %v1691
    %v1693 = vpop.f32.mrf.mxu0
    %1694 = vdwg.mxu0
    %1695 = vmatpush.bf16.msra.mxu0 %v1287
    %1696 = vmatpush.bf16.msra.mxu0 %v1283
    %1697 = vmatpush.bf16.msra.mxu0 %v1279
    %1698 = vmatpush.bf16.msra.mxu0 %v1275
    %1699 = vmatpush.bf16.msra.mxu0 %v1271
    %1700 = vmatpush.bf16.msra.mxu0 %v1267
    %1701 = vmatpush.bf16.msra.mxu0 %v1263
    %1702 = vmatpush.bf16.msra.mxu0 %v1259
    %1703 = vmatmul.bf16.gmra.mxu0 %v93
    %v1704 = vpop.f32.mrf.mxu0
    %v1705 = vadd.f32 %v1692, %v1704
    %v1706 = vpop.f32.mrf.mxu0
    %1707 = vdwg.mxu0
    %1708 = vmatpush.bf16.msra.mxu0 %v1319
    %1709 = vmatpush.bf16.msra.mxu0 %v1315
    %1710 = vmatpush.bf16.msra.mxu0 %v1311
    %1711 = vmatpush.bf16.msra.mxu0 %v1307
    %1712 = vmatpush.bf16.msra.mxu0 %v1303
    %1713 = vmatpush.bf16.msra.mxu0 %v1299
    %1714 = vmatpush.bf16.msra.mxu0 %v1295
    %1715 = vmatpush.bf16.msra.mxu0 %v1291
    %1716 = vmatmul.bf16.gmra.mxu0 %v94
    %v1717 = vpop.f32.mrf.mxu0
    %v1718 = vadd.f32 %v1705, %v1717
    %v1719 = vpop.f32.mrf.mxu0
    %1720 = vdwg.mxu0
    %1721 = vmatpush.bf16.msra.mxu0 %v1351
    %1722 = vmatpush.bf16.msra.mxu0 %v1347
    %1723 = vmatpush.bf16.msra.mxu0 %v1343
    %1724 = vmatpush.bf16.msra.mxu0 %v1339
    %1725 = vmatpush.bf16.msra.mxu0 %v1335
    %1726 = vmatpush.bf16.msra.mxu0 %v1331
    %1727 = vmatpush.bf16.msra.mxu0 %v1327
    %1728 = vmatpush.bf16.msra.mxu0 %v1323
    %1729 = vmatmul.bf16.gmra.mxu0 %v95
    %v1730 = vpop.f32.mrf.mxu0
    %v1731 = vadd.f32 %v1718, %v1730
    %v1732 = vpop.f32.mrf.mxu0
    %1733 = vdwg.mxu0
    %1734 = vmatpush.bf16.msra.mxu0 %v1383
    %1735 = vmatpush.bf16.msra.mxu0 %v1379
    %1736 = vmatpush.bf16.msra.mxu0 %v1375
    %1737 = vmatpush.bf16.msra.mxu0 %v1371
    %1738 = vmatpush.bf16.msra.mxu0 %v1367
    %1739 = vmatpush.bf16.msra.mxu0 %v1363
    %1740 = vmatpush.bf16.msra.mxu0 %v1359
    %1741 = vmatpush.bf16.msra.mxu0 %v1355
    %1742 = vmatmul.bf16.gmra.mxu0 %v96
    %v1743 = vpop.f32.mrf.mxu0
    %v1744 = vadd.f32 %v1731, %v1743
    %v1745 = vpop.f32.mrf.mxu0
    %1746 = vdwg.mxu0
    %1747 = vmatpush.bf16.msra.mxu0 %v1160
    %1748 = vmatpush.bf16.msra.mxu0 %v1156
    %1749 = vmatpush.bf16.msra.mxu0 %v1152
    %1750 = vmatpush.bf16.msra.mxu0 %v1148
    %1751 = vmatpush.bf16.msra.mxu0 %v1144
    %1752 = vmatpush.bf16.msra.mxu0 %v1140
    %1753 = vmatpush.bf16.msra.mxu0 %v1136
    %1754 = vmatpush.bf16.msra.mxu0 %v1132
    %1755 = vmatmul.bf16.gmra.mxu0 %v89
    %v1756 = vpop.f32.mrf.mxu0
    %v1757 = vadd.f32 %v356, %v1756
    %v1758 = vpop.f32.mrf.mxu0
    %1759 = vdwg.mxu0
    %1760 = vmatpush.bf16.msra.mxu0 %v1192
    %1761 = vmatpush.bf16.msra.mxu0 %v1188
    %1762 = vmatpush.bf16.msra.mxu0 %v1184
    %1763 = vmatpush.bf16.msra.mxu0 %v1180
    %1764 = vmatpush.bf16.msra.mxu0 %v1176
    %1765 = vmatpush.bf16.msra.mxu0 %v1172
    %1766 = vmatpush.bf16.msra.mxu0 %v1168
    %1767 = vmatpush.bf16.msra.mxu0 %v1164
    %1768 = vmatmul.bf16.gmra.mxu0 %v90
    %v1769 = vpop.f32.mrf.mxu0
    %v1770 = vadd.f32 %v1757, %v1769
    %v1771 = vpop.f32.mrf.mxu0
    %1772 = vdwg.mxu0
    %1773 = vmatpush.bf16.msra.mxu0 %v1224
    %1774 = vmatpush.bf16.msra.mxu0 %v1220
    %1775 = vmatpush.bf16.msra.mxu0 %v1216
    %1776 = vmatpush.bf16.msra.mxu0 %v1212
    %1777 = vmatpush.bf16.msra.mxu0 %v1208
    %1778 = vmatpush.bf16.msra.mxu0 %v1204
    %1779 = vmatpush.bf16.msra.mxu0 %v1200
    %1780 = vmatpush.bf16.msra.mxu0 %v1196
    %1781 = vmatmul.bf16.gmra.mxu0 %v91
    %v1782 = vpop.f32.mrf.mxu0
    %v1783 = vadd.f32 %v1770, %v1782
    %v1784 = vpop.f32.mrf.mxu0
    %1785 = vdwg.mxu0
    %1786 = vmatpush.bf16.msra.mxu0 %v1256
    %1787 = vmatpush.bf16.msra.mxu0 %v1252
    %1788 = vmatpush.bf16.msra.mxu0 %v1248
    %1789 = vmatpush.bf16.msra.mxu0 %v1244
    %1790 = vmatpush.bf16.msra.mxu0 %v1240
    %1791 = vmatpush.bf16.msra.mxu0 %v1236
    %1792 = vmatpush.bf16.msra.mxu0 %v1232
    %1793 = vmatpush.bf16.msra.mxu0 %v1228
    %1794 = vmatmul.bf16.gmra.mxu0 %v92
    %v1795 = vpop.f32.mrf.mxu0
    %v1796 = vadd.f32 %v1783, %v1795
    %v1797 = vpop.f32.mrf.mxu0
    %1798 = vdwg.mxu0
    %1799 = vmatpush.bf16.msra.mxu0 %v1288
    %1800 = vmatpush.bf16.msra.mxu0 %v1284
    %1801 = vmatpush.bf16.msra.mxu0 %v1280
    %1802 = vmatpush.bf16.msra.mxu0 %v1276
    %1803 = vmatpush.bf16.msra.mxu0 %v1272
    %1804 = vmatpush.bf16.msra.mxu0 %v1268
    %1805 = vmatpush.bf16.msra.mxu0 %v1264
    %1806 = vmatpush.bf16.msra.mxu0 %v1260
    %1807 = vmatmul.bf16.gmra.mxu0 %v93
    %v1808 = vpop.f32.mrf.mxu0
    %v1809 = vadd.f32 %v1796, %v1808
    %v1810 = vpop.f32.mrf.mxu0
    %1811 = vdwg.mxu0
    %1812 = vmatpush.bf16.msra.mxu0 %v1320
    %1813 = vmatpush.bf16.msra.mxu0 %v1316
    %1814 = vmatpush.bf16.msra.mxu0 %v1312
    %1815 = vmatpush.bf16.msra.mxu0 %v1308
    %1816 = vmatpush.bf16.msra.mxu0 %v1304
    %1817 = vmatpush.bf16.msra.mxu0 %v1300
    %1818 = vmatpush.bf16.msra.mxu0 %v1296
    %1819 = vmatpush.bf16.msra.mxu0 %v1292
    %1820 = vmatmul.bf16.gmra.mxu0 %v94
    %v1821 = vpop.f32.mrf.mxu0
    %v1822 = vadd.f32 %v1809, %v1821
    %v1823 = vpop.f32.mrf.mxu0
    %1824 = vdwg.mxu0
    %1825 = vmatpush.bf16.msra.mxu0 %v1352
    %1826 = vmatpush.bf16.msra.mxu0 %v1348
    %1827 = vmatpush.bf16.msra.mxu0 %v1344
    %1828 = vmatpush.bf16.msra.mxu0 %v1340
    %1829 = vmatpush.bf16.msra.mxu0 %v1336
    %1830 = vmatpush.bf16.msra.mxu0 %v1332
    %1831 = vmatpush.bf16.msra.mxu0 %v1328
    %1832 = vmatpush.bf16.msra.mxu0 %v1324
    %1833 = vmatmul.bf16.gmra.mxu0 %v95
    %v1834 = vpop.f32.mrf.mxu0
    %v1835 = vadd.f32 %v1822, %v1834
    %v1836 = vpop.f32.mrf.mxu0
    %1837 = vdwg.mxu0
    %1838 = vmatpush.bf16.msra.mxu0 %v1384
    %1839 = vmatpush.bf16.msra.mxu0 %v1380
    %1840 = vmatpush.bf16.msra.mxu0 %v1376
    %1841 = vmatpush.bf16.msra.mxu0 %v1372
    %1842 = vmatpush.bf16.msra.mxu0 %v1368
    %1843 = vmatpush.bf16.msra.mxu0 %v1364
    %1844 = vmatpush.bf16.msra.mxu0 %v1360
    %1845 = vmatpush.bf16.msra.mxu0 %v1356
    %1846 = vmatmul.bf16.gmra.mxu0 %v96
    %v1847 = vpop.f32.mrf.mxu0
    %v1848 = vadd.f32 %v1835, %v1847
    %v1849 = vpop.f32.mrf.mxu0
    %1850 = vdwg.mxu0
    %1851 = vmatpush.bf16.msra.mxu0 %v1161
    %1852 = vmatpush.bf16.msra.mxu0 %v1157
    %1853 = vmatpush.bf16.msra.mxu0 %v1153
    %1854 = vmatpush.bf16.msra.mxu0 %v1149
    %1855 = vmatpush.bf16.msra.mxu0 %v1145
    %1856 = vmatpush.bf16.msra.mxu0 %v1141
    %1857 = vmatpush.bf16.msra.mxu0 %v1137
    %1858 = vmatpush.bf16.msra.mxu0 %v1133
    %1859 = vmatmul.bf16.gmra.mxu0 %v89
    %v1860 = vpop.f32.mrf.mxu0
    %v1861 = vadd.f32 %v357, %v1860
    %v1862 = vpop.f32.mrf.mxu0
    %1863 = vdwg.mxu0
    %1864 = vmatpush.bf16.msra.mxu0 %v1193
    %1865 = vmatpush.bf16.msra.mxu0 %v1189
    %1866 = vmatpush.bf16.msra.mxu0 %v1185
    %1867 = vmatpush.bf16.msra.mxu0 %v1181
    %1868 = vmatpush.bf16.msra.mxu0 %v1177
    %1869 = vmatpush.bf16.msra.mxu0 %v1173
    %1870 = vmatpush.bf16.msra.mxu0 %v1169
    %1871 = vmatpush.bf16.msra.mxu0 %v1165
    %1872 = vmatmul.bf16.gmra.mxu0 %v90
    %v1873 = vpop.f32.mrf.mxu0
    %v1874 = vadd.f32 %v1861, %v1873
    %v1875 = vpop.f32.mrf.mxu0
    %1876 = vdwg.mxu0
    %1877 = vmatpush.bf16.msra.mxu0 %v1225
    %1878 = vmatpush.bf16.msra.mxu0 %v1221
    %1879 = vmatpush.bf16.msra.mxu0 %v1217
    %1880 = vmatpush.bf16.msra.mxu0 %v1213
    %1881 = vmatpush.bf16.msra.mxu0 %v1209
    %1882 = vmatpush.bf16.msra.mxu0 %v1205
    %1883 = vmatpush.bf16.msra.mxu0 %v1201
    %1884 = vmatpush.bf16.msra.mxu0 %v1197
    %1885 = vmatmul.bf16.gmra.mxu0 %v91
    %v1886 = vpop.f32.mrf.mxu0
    %v1887 = vadd.f32 %v1874, %v1886
    %v1888 = vpop.f32.mrf.mxu0
    %1889 = vdwg.mxu0
    %1890 = vmatpush.bf16.msra.mxu0 %v1257
    %1891 = vmatpush.bf16.msra.mxu0 %v1253
    %1892 = vmatpush.bf16.msra.mxu0 %v1249
    %1893 = vmatpush.bf16.msra.mxu0 %v1245
    %1894 = vmatpush.bf16.msra.mxu0 %v1241
    %1895 = vmatpush.bf16.msra.mxu0 %v1237
    %1896 = vmatpush.bf16.msra.mxu0 %v1233
    %1897 = vmatpush.bf16.msra.mxu0 %v1229
    %1898 = vmatmul.bf16.gmra.mxu0 %v92
    %v1899 = vpop.f32.mrf.mxu0
    %v1900 = vadd.f32 %v1887, %v1899
    %v1901 = vpop.f32.mrf.mxu0
    %1902 = vdwg.mxu0
    %1903 = vmatpush.bf16.msra.mxu0 %v1289
    %1904 = vmatpush.bf16.msra.mxu0 %v1285
    %1905 = vmatpush.bf16.msra.mxu0 %v1281
    %1906 = vmatpush.bf16.msra.mxu0 %v1277
    %1907 = vmatpush.bf16.msra.mxu0 %v1273
    %1908 = vmatpush.bf16.msra.mxu0 %v1269
    %1909 = vmatpush.bf16.msra.mxu0 %v1265
    %1910 = vmatpush.bf16.msra.mxu0 %v1261
    %1911 = vmatmul.bf16.gmra.mxu0 %v93
    %v1912 = vpop.f32.mrf.mxu0
    %v1913 = vadd.f32 %v1900, %v1912
    %v1914 = vpop.f32.mrf.mxu0
    %1915 = vdwg.mxu0
    %1916 = vmatpush.bf16.msra.mxu0 %v1321
    %1917 = vmatpush.bf16.msra.mxu0 %v1317
    %1918 = vmatpush.bf16.msra.mxu0 %v1313
    %1919 = vmatpush.bf16.msra.mxu0 %v1309
    %1920 = vmatpush.bf16.msra.mxu0 %v1305
    %1921 = vmatpush.bf16.msra.mxu0 %v1301
    %1922 = vmatpush.bf16.msra.mxu0 %v1297
    %1923 = vmatpush.bf16.msra.mxu0 %v1293
    %1924 = vmatmul.bf16.gmra.mxu0 %v94
    %v1925 = vpop.f32.mrf.mxu0
    %v1926 = vadd.f32 %v1913, %v1925
    %v1927 = vpop.f32.mrf.mxu0
    %1928 = vdwg.mxu0
    %1929 = vmatpush.bf16.msra.mxu0 %v1353
    %1930 = vmatpush.bf16.msra.mxu0 %v1349
    %1931 = vmatpush.bf16.msra.mxu0 %v1345
    %1932 = vmatpush.bf16.msra.mxu0 %v1341
    %1933 = vmatpush.bf16.msra.mxu0 %v1337
    %1934 = vmatpush.bf16.msra.mxu0 %v1333
    %1935 = vmatpush.bf16.msra.mxu0 %v1329
    %1936 = vmatpush.bf16.msra.mxu0 %v1325
    %1937 = vmatmul.bf16.gmra.mxu0 %v95
    %v1938 = vpop.f32.mrf.mxu0
    %v1939 = vadd.f32 %v1926, %v1938
    %v1940 = vpop.f32.mrf.mxu0
    %1941 = vdwg.mxu0
    %1942 = vmatpush.bf16.msra.mxu0 %v1385
    %1943 = vmatpush.bf16.msra.mxu0 %v1381
    %1944 = vmatpush.bf16.msra.mxu0 %v1377
    %1945 = vmatpush.bf16.msra.mxu0 %v1373
    %1946 = vmatpush.bf16.msra.mxu0 %v1369
    %1947 = vmatpush.bf16.msra.mxu0 %v1365
    %1948 = vmatpush.bf16.msra.mxu0 %v1361
    %1949 = vmatpush.bf16.msra.mxu0 %v1357
    %1950 = vmatmul.bf16.gmra.mxu0 %v96
    %v1951 = vpop.f32.mrf.mxu0
    %v1952 = vadd.f32 %v1939, %v1951
    %v1953 = vpop.f32.mrf.mxu0
    %1954 = vdwg.mxu0
    %1955 = vmatpush.bf16.msra.mxu0 %v1162
    %1956 = vmatpush.bf16.msra.mxu0 %v1158
    %1957 = vmatpush.bf16.msra.mxu0 %v1154
    %1958 = vmatpush.bf16.msra.mxu0 %v1150
    %1959 = vmatpush.bf16.msra.mxu0 %v1146
    %1960 = vmatpush.bf16.msra.mxu0 %v1142
    %1961 = vmatpush.bf16.msra.mxu0 %v1138
    %1962 = vmatpush.bf16.msra.mxu0 %v1134
    %1963 = vmatmul.bf16.gmra.mxu0 %v89
    %v1964 = vpop.f32.mrf.mxu0
    %v1965 = vadd.f32 %v358, %v1964
    %v1966 = vpop.f32.mrf.mxu0
    %1967 = vdwg.mxu0
    %1968 = vmatpush.bf16.msra.mxu0 %v1194
    %1969 = vmatpush.bf16.msra.mxu0 %v1190
    %1970 = vmatpush.bf16.msra.mxu0 %v1186
    %1971 = vmatpush.bf16.msra.mxu0 %v1182
    %1972 = vmatpush.bf16.msra.mxu0 %v1178
    %1973 = vmatpush.bf16.msra.mxu0 %v1174
    %1974 = vmatpush.bf16.msra.mxu0 %v1170
    %1975 = vmatpush.bf16.msra.mxu0 %v1166
    %1976 = vmatmul.bf16.gmra.mxu0 %v90
    %v1977 = vpop.f32.mrf.mxu0
    %v1978 = vadd.f32 %v1965, %v1977
    %v1979 = vpop.f32.mrf.mxu0
    %1980 = vdwg.mxu0
    %1981 = vmatpush.bf16.msra.mxu0 %v1226
    %1982 = vmatpush.bf16.msra.mxu0 %v1222
    %1983 = vmatpush.bf16.msra.mxu0 %v1218
    %1984 = vmatpush.bf16.msra.mxu0 %v1214
    %1985 = vmatpush.bf16.msra.mxu0 %v1210
    %1986 = vmatpush.bf16.msra.mxu0 %v1206
    %1987 = vmatpush.bf16.msra.mxu0 %v1202
    %1988 = vmatpush.bf16.msra.mxu0 %v1198
    %1989 = vmatmul.bf16.gmra.mxu0 %v91
    %v1990 = vpop.f32.mrf.mxu0
    %v1991 = vadd.f32 %v1978, %v1990
    %v1992 = vpop.f32.mrf.mxu0
    %1993 = vdwg.mxu0
    %1994 = vmatpush.bf16.msra.mxu0 %v1258
    %1995 = vmatpush.bf16.msra.mxu0 %v1254
    %1996 = vmatpush.bf16.msra.mxu0 %v1250
    %1997 = vmatpush.bf16.msra.mxu0 %v1246
    %1998 = vmatpush.bf16.msra.mxu0 %v1242
    %1999 = vmatpush.bf16.msra.mxu0 %v1238
    %2000 = vmatpush.bf16.msra.mxu0 %v1234
    %2001 = vmatpush.bf16.msra.mxu0 %v1230
    %2002 = vmatmul.bf16.gmra.mxu0 %v92
    %v2003 = vpop.f32.mrf.mxu0
    %v2004 = vadd.f32 %v1991, %v2003
    %v2005 = vpop.f32.mrf.mxu0
    %2006 = vdwg.mxu0
    %2007 = vmatpush.bf16.msra.mxu0 %v1290
    %2008 = vmatpush.bf16.msra.mxu0 %v1286
    %2009 = vmatpush.bf16.msra.mxu0 %v1282
    %2010 = vmatpush.bf16.msra.mxu0 %v1278
    %2011 = vmatpush.bf16.msra.mxu0 %v1274
    %2012 = vmatpush.bf16.msra.mxu0 %v1270
    %2013 = vmatpush.bf16.msra.mxu0 %v1266
    %2014 = vmatpush.bf16.msra.mxu0 %v1262
    %2015 = vmatmul.bf16.gmra.mxu0 %v93
    %v2016 = vpop.f32.mrf.mxu0
    %v2017 = vadd.f32 %v2004, %v2016
    %v2018 = vpop.f32.mrf.mxu0
    %2019 = vdwg.mxu0
    %2020 = vmatpush.bf16.msra.mxu0 %v1322
    %2021 = vmatpush.bf16.msra.mxu0 %v1318
    %2022 = vmatpush.bf16.msra.mxu0 %v1314
    %2023 = vmatpush.bf16.msra.mxu0 %v1310
    %2024 = vmatpush.bf16.msra.mxu0 %v1306
    %2025 = vmatpush.bf16.msra.mxu0 %v1302
    %2026 = vmatpush.bf16.msra.mxu0 %v1298
    %2027 = vmatpush.bf16.msra.mxu0 %v1294
    %2028 = vmatmul.bf16.gmra.mxu0 %v94
    %v2029 = vpop.f32.mrf.mxu0
    %v2030 = vadd.f32 %v2017, %v2029
    %v2031 = vpop.f32.mrf.mxu0
    %2032 = vdwg.mxu0
    %2033 = vmatpush.bf16.msra.mxu0 %v1354
    %2034 = vmatpush.bf16.msra.mxu0 %v1350
    %2035 = vmatpush.bf16.msra.mxu0 %v1346
    %2036 = vmatpush.bf16.msra.mxu0 %v1342
    %2037 = vmatpush.bf16.msra.mxu0 %v1338
    %2038 = vmatpush.bf16.msra.mxu0 %v1334
    %2039 = vmatpush.bf16.msra.mxu0 %v1330
    %2040 = vmatpush.bf16.msra.mxu0 %v1326
    %2041 = vmatmul.bf16.gmra.mxu0 %v95
    %v2042 = vpop.f32.mrf.mxu0
    %v2043 = vadd.f32 %v2030, %v2042
    %v2044 = vpop.f32.mrf.mxu0
    %2045 = vdwg.mxu0
    %2046 = vmatpush.bf16.msra.mxu0 %v1386
    %2047 = vmatpush.bf16.msra.mxu0 %v1382
    %2048 = vmatpush.bf16.msra.mxu0 %v1378
    %2049 = vmatpush.bf16.msra.mxu0 %v1374
    %2050 = vmatpush.bf16.msra.mxu0 %v1370
    %2051 = vmatpush.bf16.msra.mxu0 %v1366
    %2052 = vmatpush.bf16.msra.mxu0 %v1362
    %2053 = vmatpush.bf16.msra.mxu0 %v1358
    %2054 = vmatmul.bf16.gmra.mxu0 %v96
    %v2055 = vpop.f32.mrf.mxu0
    %v2056 = vadd.f32 %v2043, %v2055
    %v2057 = vpop.f32.mrf.mxu0
    %2058 = vdwg.mxu0
    %v2059 = vmax.f32 %v1744, 0.0
    %v2060 = vmax.f32 %v1848, 0.0
    %v2061 = vmax.f32 %v1952, 0.0
    %v2062 = vmax.f32 %v2056, 0.0
    %v2063 = vpack.c.bf16 %v2059, %v2059
    %v2064 = vpack.c.bf16 %v2060, %v2060
    %v2065 = vpack.c.bf16 %v2061, %v2061
    %v2066 = vpack.c.bf16 %v2062, %v2062
    %v2067 = vld [vmem:[#allocation5] sm:$0xff]
    %v2068 = vld [vmem:[#allocation5 + $0x8] sm:$0xff]
    %v2069 = vld [vmem:[#allocation5 + $0x10] sm:$0xff]
    %v2070 = vld [vmem:[#allocation5 + $0x18] sm:$0xff]
    %v2071 = vld [vmem:[#allocation5 + $0x20] sm:$0xff]
    %v2072 = vld [vmem:[#allocation5 + $0x28] sm:$0xff]
    %v2073 = vld [vmem:[#allocation5 + $0x30] sm:$0xff]
    %v2074 = vld [vmem:[#allocation5 + $0x38] sm:$0xff]
    %v2075 = vld [vmem:[#allocation5 + $0x40] sm:$0xff]
    %v2076 = vld [vmem:[#allocation5 + $0x48] sm:$0xff]
    %v2077 = vld [vmem:[#allocation5 + $0x50] sm:$0xff]
    %v2078 = vld [vmem:[#allocation5 + $0x58] sm:$0xff]
    %v2079 = vld [vmem:[#allocation5 + $0x60] sm:$0xff]
    %v2080 = vld [vmem:[#allocation5 + $0x68] sm:$0xff]
    %v2081 = vld [vmem:[#allocation5 + $0x70] sm:$0xff]
    %v2082 = vld [vmem:[#allocation5 + $0x78] sm:$0xff]
    %v2083 = vld [vmem:[#allocation5 + $0x80] sm:$0xff]
    %v2084 = vld [vmem:[#allocation5 + $0x88] sm:$0xff]
    %v2085 = vld [vmem:[#allocation5 + $0x90] sm:$0xff]
    %v2086 = vld [vmem:[#allocation5 + $0x98] sm:$0xff]
    %v2087 = vld [vmem:[#allocation5 + $0xa0] sm:$0xff]
    %v2088 = vld [vmem:[#allocation5 + $0xa8] sm:$0xff]
    %v2089 = vld [vmem:[#allocation5 + $0xb0] sm:$0xff]
    %v2090 = vld [vmem:[#allocation5 + $0xb8] sm:$0xff]
    %v2091 = vld [vmem:[#allocation5 + $0xc0] sm:$0xff]
    %v2092 = vld [vmem:[#allocation5 + $0xc8] sm:$0xff]
    %v2093 = vld [vmem:[#allocation5 + $0xd0] sm:$0xff]
    %v2094 = vld [vmem:[#allocation5 + $0xd8] sm:$0xff]
    %v2095 = vld [vmem:[#allocation5 + $0xe0] sm:$0xff]
    %v2096 = vld [vmem:[#allocation5 + $0xe8] sm:$0xff]
    %v2097 = vld [vmem:[#allocation5 + $0xf0] sm:$0xff]
    %v2098 = vld [vmem:[#allocation5 + $0xf8] sm:$0xff]
    %v2099 = vld [vmem:[#allocation5 + $0x100] sm:$0xff]
    %v2100 = vld [vmem:[#allocation5 + $0x108] sm:$0xff]
    %v2101 = vld [vmem:[#allocation5 + $0x110] sm:$0xff]
    %v2102 = vld [vmem:[#allocation5 + $0x118] sm:$0xff]
    %v2103 = vld [vmem:[#allocation5 + $0x120] sm:$0xff]
    %v2104 = vld [vmem:[#allocation5 + $0x128] sm:$0xff]
    %v2105 = vld [vmem:[#allocation5 + $0x130] sm:$0xff]
    %v2106 = vld [vmem:[#allocation5 + $0x138] sm:$0xff]
    %v2107 = vld [vmem:[#allocation5 + $0x140] sm:$0xff]
    %v2108 = vld [vmem:[#allocation5 + $0x148] sm:$0xff]
    %v2109 = vld [vmem:[#allocation5 + $0x150] sm:$0xff]
    %v2110 = vld [vmem:[#allocation5 + $0x158] sm:$0xff]
    %v2111 = vld [vmem:[#allocation5 + $0x160] sm:$0xff]
    %v2112 = vld [vmem:[#allocation5 + $0x168] sm:$0xff]
    %v2113 = vld [vmem:[#allocation5 + $0x170] sm:$0xff]
    %v2114 = vld [vmem:[#allocation5 + $0x178] sm:$0xff]
    %v2115 = vld [vmem:[#allocation5 + $0x180] sm:$0xff]
    %v2116 = vld [vmem:[#allocation5 + $0x188] sm:$0xff]
    %v2117 = vld [vmem:[#allocation5 + $0x190] sm:$0xff]
    %v2118 = vld [vmem:[#allocation5 + $0x198] sm:$0xff]
    %v2119 = vld [vmem:[#allocation5 + $0x1a0] sm:$0xff]
    %v2120 = vld [vmem:[#allocation5 + $0x1a8] sm:$0xff]
    %v2121 = vld [vmem:[#allocation5 + $0x1b0] sm:$0xff]
    %v2122 = vld [vmem:[#allocation5 + $0x1b8] sm:$0xff]
    %v2123 = vld [vmem:[#allocation5 + $0x1c0] sm:$0xff]
    %v2124 = vld [vmem:[#allocation5 + $0x1c8] sm:$0xff]
    %v2125 = vld [vmem:[#allocation5 + $0x1d0] sm:$0xff]
    %v2126 = vld [vmem:[#allocation5 + $0x1d8] sm:$0xff]
    %v2127 = vld [vmem:[#allocation5 + $0x1e0] sm:$0xff]
    %v2128 = vld [vmem:[#allocation5 + $0x1e8] sm:$0xff]
    %v2129 = vld [vmem:[#allocation5 + $0x1f0] sm:$0xff]
    %v2130 = vld [vmem:[#allocation5 + $0x1f8] sm:$0xff]
    %v2131 = vld [vmem:[%s4] sm:$0x3]
    %v2133 = vperm.slane %v2131, 0
    %v2134 = vperm.slane %v2131, 1
    %v2201 = vunpack.c.l.b16 %v2067
    %v2202 = vunpack.c.h.b16 %v2067
    %v2203 = vunpack.c.l.b16 %v2068
    %v2204 = vunpack.c.h.b16 %v2068
    %v2205 = vunpack.c.l.b16 %v2069
    %v2206 = vunpack.c.h.b16 %v2069
    %v2207 = vunpack.c.l.b16 %v2070
    %v2208 = vunpack.c.h.b16 %v2070
    %v2209 = vunpack.c.l.b16 %v2071
    %v2210 = vunpack.c.h.b16 %v2071
    %v2211 = vunpack.c.l.b16 %v2072
    %v2212 = vunpack.c.h.b16 %v2072
    %v2213 = vunpack.c.l.b16 %v2073
    %v2214 = vunpack.c.h.b16 %v2073
    %v2215 = vunpack.c.l.b16 %v2074
    %v2216 = vunpack.c.h.b16 %v2074
    %v2217 = vunpack.c.l.b16 %v2075
    %v2218 = vunpack.c.h.b16 %v2075
    %v2219 = vunpack.c.l.b16 %v2076
    %v2220 = vunpack.c.h.b16 %v2076
    %v2221 = vunpack.c.l.b16 %v2077
    %v2222 = vunpack.c.h.b16 %v2077
    %v2223 = vunpack.c.l.b16 %v2078
    %v2224 = vunpack.c.h.b16 %v2078
    %v2225 = vunpack.c.l.b16 %v2079
    %v2226 = vunpack.c.h.b16 %v2079
    %v2227 = vunpack.c.l.b16 %v2080
    %v2228 = vunpack.c.h.b16 %v2080
    %v2229 = vunpack.c.l.b16 %v2081
    %v2230 = vunpack.c.h.b16 %v2081
    %v2231 = vunpack.c.l.b16 %v2082
    %v2232 = vunpack.c.h.b16 %v2082
    %v2233 = vunpack.c.l.b16 %v2083
    %v2234 = vunpack.c.h.b16 %v2083
    %v2235 = vunpack.c.l.b16 %v2084
    %v2236 = vunpack.c.h.b16 %v2084
    %v2237 = vunpack.c.l.b16 %v2085
    %v2238 = vunpack.c.h.b16 %v2085
    %v2239 = vunpack.c.l.b16 %v2086
    %v2240 = vunpack.c.h.b16 %v2086
    %v2241 = vunpack.c.l.b16 %v2087
    %v2242 = vunpack.c.h.b16 %v2087
    %v2243 = vunpack.c.l.b16 %v2088
    %v2244 = vunpack.c.h.b16 %v2088
    %v2245 = vunpack.c.l.b16 %v2089
    %v2246 = vunpack.c.h.b16 %v2089
    %v2247 = vunpack.c.l.b16 %v2090
    %v2248 = vunpack.c.h.b16 %v2090
    %v2249 = vunpack.c.l.b16 %v2091
    %v2250 = vunpack.c.h.b16 %v2091
    %v2251 = vunpack.c.l.b16 %v2092
    %v2252 = vunpack.c.h.b16 %v2092
    %v2253 = vunpack.c.l.b16 %v2093
    %v2254 = vunpack.c.h.b16 %v2093
    %v2255 = vunpack.c.l.b16 %v2094
    %v2256 = vunpack.c.h.b16 %v2094
    %v2257 = vunpack.c.l.b16 %v2095
    %v2258 = vunpack.c.h.b16 %v2095
    %v2259 = vunpack.c.l.b16 %v2096
    %v2260 = vunpack.c.h.b16 %v2096
    %v2261 = vunpack.c.l.b16 %v2097
    %v2262 = vunpack.c.h.b16 %v2097
    %v2263 = vunpack.c.l.b16 %v2098
    %v2264 = vunpack.c.h.b16 %v2098
    %v2265 = vunpack.c.l.b16 %v2099
    %v2266 = vunpack.c.h.b16 %v2099
    %v2267 = vunpack.c.l.b16 %v2100
    %v2268 = vunpack.c.h.b16 %v2100
    %v2269 = vunpack.c.l.b16 %v2101
    %v2270 = vunpack.c.h.b16 %v2101
    %v2271 = vunpack.c.l.b16 %v2102
    %v2272 = vunpack.c.h.b16 %v2102
    %v2273 = vunpack.c.l.b16 %v2103
    %v2274 = vunpack.c.h.b16 %v2103
    %v2275 = vunpack.c.l.b16 %v2104
    %v2276 = vunpack.c.h.b16 %v2104
    %v2277 = vunpack.c.l.b16 %v2105
    %v2278 = vunpack.c.h.b16 %v2105
    %v2279 = vunpack.c.l.b16 %v2106
    %v2280 = vunpack.c.h.b16 %v2106
    %v2281 = vunpack.c.l.b16 %v2107
    %v2282 = vunpack.c.h.b16 %v2107
    %v2283 = vunpack.c.l.b16 %v2108
    %v2284 = vunpack.c.h.b16 %v2108
    %v2285 = vunpack.c.l.b16 %v2109
    %v2286 = vunpack.c.h.b16 %v2109
    %v2287 = vunpack.c.l.b16 %v2110
    %v2288 = vunpack.c.h.b16 %v2110
    %v2289 = vunpack.c.l.b16 %v2111
    %v2290 = vunpack.c.h.b16 %v2111
    %v2291 = vunpack.c.l.b16 %v2112
    %v2292 = vunpack.c.h.b16 %v2112
    %v2293 = vunpack.c.l.b16 %v2113
    %v2294 = vunpack.c.h.b16 %v2113
    %v2295 = vunpack.c.l.b16 %v2114
    %v2296 = vunpack.c.h.b16 %v2114
    %v2297 = vunpack.c.l.b16 %v2115
    %v2298 = vunpack.c.h.b16 %v2115
    %v2299 = vunpack.c.l.b16 %v2116
    %v2300 = vunpack.c.h.b16 %v2116
    %v2301 = vunpack.c.l.b16 %v2117
    %v2302 = vunpack.c.h.b16 %v2117
    %v2303 = vunpack.c.l.b16 %v2118
    %v2304 = vunpack.c.h.b16 %v2118
    %v2305 = vunpack.c.l.b16 %v2119
    %v2306 = vunpack.c.h.b16 %v2119
    %v2307 = vunpack.c.l.b16 %v2120
    %v2308 = vunpack.c.h.b16 %v2120
    %v2309 = vunpack.c.l.b16 %v2121
    %v2310 = vunpack.c.h.b16 %v2121
    %v2311 = vunpack.c.l.b16 %v2122
    %v2312 = vunpack.c.h.b16 %v2122
    %v2313 = vunpack.c.l.b16 %v2123
    %v2314 = vunpack.c.h.b16 %v2123
    %v2315 = vunpack.c.l.b16 %v2124
    %v2316 = vunpack.c.h.b16 %v2124
    %v2317 = vunpack.c.l.b16 %v2125
    %v2318 = vunpack.c.h.b16 %v2125
    %v2319 = vunpack.c.l.b16 %v2126
    %v2320 = vunpack.c.h.b16 %v2126
    %v2321 = vunpack.c.l.b16 %v2127
    %v2322 = vunpack.c.h.b16 %v2127
    %v2323 = vunpack.c.l.b16 %v2128
    %v2324 = vunpack.c.h.b16 %v2128
    %v2325 = vunpack.c.l.b16 %v2129
    %v2326 = vunpack.c.h.b16 %v2129
    %v2327 = vunpack.c.l.b16 %v2130
    %v2328 = vunpack.c.h.b16 %v2130
    %v2329 = vpack.c.b16 %v2203, %v2201
    %v2330 = vpack.c.b16 %v2204, %v2202
    %v2331 = vpack.c.b16 %v2207, %v2205
    %v2332 = vpack.c.b16 %v2208, %v2206
    %v2333 = vpack.c.b16 %v2211, %v2209
    %v2334 = vpack.c.b16 %v2212, %v2210
    %v2335 = vpack.c.b16 %v2215, %v2213
    %v2336 = vpack.c.b16 %v2216, %v2214
    %v2337 = vpack.c.b16 %v2219, %v2217
    %v2338 = vpack.c.b16 %v2220, %v2218
    %v2339 = vpack.c.b16 %v2223, %v2221
    %v2340 = vpack.c.b16 %v2224, %v2222
    %v2341 = vpack.c.b16 %v2227, %v2225
    %v2342 = vpack.c.b16 %v2228, %v2226
    %v2343 = vpack.c.b16 %v2231, %v2229
    %v2344 = vpack.c.b16 %v2232, %v2230
    %v2345 = vpack.c.b16 %v2235, %v2233
    %v2346 = vpack.c.b16 %v2236, %v2234
    %v2347 = vpack.c.b16 %v2239, %v2237
    %v2348 = vpack.c.b16 %v2240, %v2238
    %v2349 = vpack.c.b16 %v2243, %v2241
    %v2350 = vpack.c.b16 %v2244, %v2242
    %v2351 = vpack.c.b16 %v2247, %v2245
    %v2352 = vpack.c.b16 %v2248, %v2246
    %v2353 = vpack.c.b16 %v2251, %v2249
    %v2354 = vpack.c.b16 %v2252, %v2250
    %v2355 = vpack.c.b16 %v2255, %v2253
    %v2356 = vpack.c.b16 %v2256, %v2254
    %v2357 = vpack.c.b16 %v2259, %v2257
    %v2358 = vpack.c.b16 %v2260, %v2258
    %v2359 = vpack.c.b16 %v2263, %v2261
    %v2360 = vpack.c.b16 %v2264, %v2262
    %v2361 = vpack.c.b16 %v2267, %v2265
    %v2362 = vpack.c.b16 %v2268, %v2266
    %v2363 = vpack.c.b16 %v2271, %v2269
    %v2364 = vpack.c.b16 %v2272, %v2270
    %v2365 = vpack.c.b16 %v2275, %v2273
    %v2366 = vpack.c.b16 %v2276, %v2274
    %v2367 = vpack.c.b16 %v2279, %v2277
    %v2368 = vpack.c.b16 %v2280, %v2278
    %v2369 = vpack.c.b16 %v2283, %v2281
    %v2370 = vpack.c.b16 %v2284, %v2282
    %v2371 = vpack.c.b16 %v2287, %v2285
    %v2372 = vpack.c.b16 %v2288, %v2286
    %v2373 = vpack.c.b16 %v2291, %v2289
    %v2374 = vpack.c.b16 %v2292, %v2290
    %v2375 = vpack.c.b16 %v2295, %v2293
    %v2376 = vpack.c.b16 %v2296, %v2294
    %v2377 = vpack.c.b16 %v2299, %v2297
    %v2378 = vpack.c.b16 %v2300, %v2298
    %v2379 = vpack.c.b16 %v2303, %v2301
    %v2380 = vpack.c.b16 %v2304, %v2302
    %v2381 = vpack.c.b16 %v2307, %v2305
    %v2382 = vpack.c.b16 %v2308, %v2306
    %v2383 = vpack.c.b16 %v2311, %v2309
    %v2384 = vpack.c.b16 %v2312, %v2310
    %v2385 = vpack.c.b16 %v2315, %v2313
    %v2386 = vpack.c.b16 %v2316, %v2314
    %v2387 = vpack.c.b16 %v2319, %v2317
    %v2388 = vpack.c.b16 %v2320, %v2318
    %v2389 = vpack.c.b16 %v2323, %v2321
    %v2390 = vpack.c.b16 %v2324, %v2322
    %v2391 = vpack.c.b16 %v2327, %v2325
    %v2392 = vpack.c.b16 %v2328, %v2326
    %2457 = vmatpush.bf16.msra.mxu0 %v2343
    %2458 = vmatpush.bf16.msra.mxu0 %v2341
    %2459 = vmatpush.bf16.msra.mxu0 %v2339
    %2460 = vmatpush.bf16.msra.mxu0 %v2337
    %2461 = vmatpush.bf16.msra.mxu0 %v2335
    %2462 = vmatpush.bf16.msra.mxu0 %v2333
    %2463 = vmatpush.bf16.msra.mxu0 %v2331
    %2464 = vmatpush.bf16.msra.mxu0 %v2329
    %2465 = vmatmul.bf16.gmra.mxu0 %v2063
    %v2466 = vpop.f32.mrf.mxu0
    %v2467 = vadd.f32 %v2133, %v2466
    %v2468 = vpop.f32.mrf.mxu0
    %2469 = vdwg.mxu0
    %2470 = vmatpush.bf16.msra.mxu0 %v2359
    %2471 = vmatpush.bf16.msra.mxu0 %v2357
    %2472 = vmatpush.bf16.msra.mxu0 %v2355
    %2473 = vmatpush.bf16.msra.mxu0 %v2353
    %2474 = vmatpush.bf16.msra.mxu0 %v2351
    %2475 = vmatpush.bf16.msra.mxu0 %v2349
    %2476 = vmatpush.bf16.msra.mxu0 %v2347
    %2477 = vmatpush.bf16.msra.mxu0 %v2345
    %2478 = vmatmul.bf16.gmra.mxu0 %v2064
    %v2479 = vpop.f32.mrf.mxu0
    %v2480 = vadd.f32 %v2467, %v2479
    %v2481 = vpop.f32.mrf.mxu0
    %2482 = vdwg.mxu0
    %2483 = vmatpush.bf16.msra.mxu0 %v2375
    %2484 = vmatpush.bf16.msra.mxu0 %v2373
    %2485 = vmatpush.bf16.msra.mxu0 %v2371
    %2486 = vmatpush.bf16.msra.mxu0 %v2369
    %2487 = vmatpush.bf16.msra.mxu0 %v2367
    %2488 = vmatpush.bf16.msra.mxu0 %v2365
    %2489 = vmatpush.bf16.msra.mxu0 %v2363
    %2490 = vmatpush.bf16.msra.mxu0 %v2361
    %2491 = vmatmul.bf16.gmra.mxu0 %v2065
    %v2492 = vpop.f32.mrf.mxu0
    %v2493 = vadd.f32 %v2480, %v2492
    %v2494 = vpop.f32.mrf.mxu0
    %2495 = vdwg.mxu0
    %2496 = vmatpush.bf16.msra.mxu0 %v2391
    %2497 = vmatpush.bf16.msra.mxu0 %v2389
    %2498 = vmatpush.bf16.msra.mxu0 %v2387
    %2499 = vmatpush.bf16.msra.mxu0 %v2385
    %2500 = vmatpush.bf16.msra.mxu0 %v2383
    %2501 = vmatpush.bf16.msra.mxu0 %v2381
    %2502 = vmatpush.bf16.msra.mxu0 %v2379
    %2503 = vmatpush.bf16.msra.mxu0 %v2377
    %2504 = vmatmul.bf16.gmra.mxu0 %v2066
    %v2505 = vpop.f32.mrf.mxu0
    %v2506 = vadd.f32 %v2493, %v2505
    %v2507 = vpop.f32.mrf.mxu0
    %2508 = vdwg.mxu0
    %2509 = vmatpush.bf16.msra.mxu0 %v2344
    %2510 = vmatpush.bf16.msra.mxu0 %v2342
    %2511 = vmatpush.bf16.msra.mxu0 %v2340
    %2512 = vmatpush.bf16.msra.mxu0 %v2338
    %2513 = vmatpush.bf16.msra.mxu0 %v2336
    %2514 = vmatpush.bf16.msra.mxu0 %v2334
    %2515 = vmatpush.bf16.msra.mxu0 %v2332
    %2516 = vmatpush.bf16.msra.mxu0 %v2330
    %2517 = vmatmul.bf16.gmra.mxu0 %v2063
    %v2518 = vpop.f32.mrf.mxu0
    %v2519 = vadd.f32 %v2134, %v2518
    %v2520 = vpop.f32.mrf.mxu0
    %2521 = vdwg.mxu0
    %2522 = vmatpush.bf16.msra.mxu0 %v2360
    %2523 = vmatpush.bf16.msra.mxu0 %v2358
    %2524 = vmatpush.bf16.msra.mxu0 %v2356
    %2525 = vmatpush.bf16.msra.mxu0 %v2354
    %2526 = vmatpush.bf16.msra.mxu0 %v2352
    %2527 = vmatpush.bf16.msra.mxu0 %v2350
    %2528 = vmatpush.bf16.msra.mxu0 %v2348
    %2529 = vmatpush.bf16.msra.mxu0 %v2346
    %2530 = vmatmul.bf16.gmra.mxu0 %v2064
    %v2531 = vpop.f32.mrf.mxu0
    %v2532 = vadd.f32 %v2519, %v2531
    %v2533 = vpop.f32.mrf.mxu0
    %2534 = vdwg.mxu0
    %2535 = vmatpush.bf16.msra.mxu0 %v2376
    %2536 = vmatpush.bf16.msra.mxu0 %v2374
    %2537 = vmatpush.bf16.msra.mxu0 %v2372
    %2538 = vmatpush.bf16.msra.mxu0 %v2370
    %2539 = vmatpush.bf16.msra.mxu0 %v2368
    %2540 = vmatpush.bf16.msra.mxu0 %v2366
    %2541 = vmatpush.bf16.msra.mxu0 %v2364
    %2542 = vmatpush.bf16.msra.mxu0 %v2362
    %2543 = vmatmul.bf16.gmra.mxu0 %v2065
    %v2544 = vpop.f32.mrf.mxu0
    %v2545 = vadd.f32 %v2532, %v2544
    %v2546 = vpop.f32.mrf.mxu0
    %2547 = vdwg.mxu0
    %2548 = vmatpush.bf16.msra.mxu0 %v2392
    %2549 = vmatpush.bf16.msra.mxu0 %v2390
    %2550 = vmatpush.bf16.msra.mxu0 %v2388
    %2551 = vmatpush.bf16.msra.mxu0 %v2386
    %2552 = vmatpush.bf16.msra.mxu0 %v2384
    %2553 = vmatpush.bf16.msra.mxu0 %v2382
    %2554 = vmatpush.bf16.msra.mxu0 %v2380
    %2555 = vmatpush.bf16.msra.mxu0 %v2378
    %2556 = vmatmul.bf16.gmra.mxu0 %v2066
    %v2557 = vpop.f32.mrf.mxu0
    %v2558 = vadd.f32 %v2545, %v2557
    %v2559 = vpop.f32.mrf.mxu0
    %2560 = vdwg.mxu0
    %v2561 = vmax.f32 %v2506, 0.0
    %v2562 = vmax.f32 %v2558, 0.0
    %v2563 = vpack.c.bf16 %v2561, %v2561
    %v2564 = vpack.c.bf16 %v2562, %v2562
    %v2565 = vld [vmem:[%s5] sm:$0xf]
    %v2566 = vld [vmem:[%s5 + $0x4] sm:$0xf]
    %v2567 = vld [vmem:[%s5 + $0x8] sm:$0xf]
    %v2568 = vld [vmem:[%s5 + $0xc] sm:$0xf]
    %v2569 = vld [vmem:[%s5 + $0x10] sm:$0xf]
    %v2570 = vld [vmem:[%s5 + $0x14] sm:$0xf]
    %v2571 = vld [vmem:[%s5 + $0x18] sm:$0xf]
    %v2572 = vld [vmem:[%s5 + $0x1c] sm:$0xf]
    %v2573 = vld [vmem:[%s5 + $0x20] sm:$0xf]
    %v2574 = vld [vmem:[%s5 + $0x24] sm:$0xf]
    %v2575 = vld [vmem:[%s5 + $0x28] sm:$0xf]
    %v2576 = vld [vmem:[%s5 + $0x2c] sm:$0xf]
    %v2577 = vld [vmem:[%s5 + $0x30] sm:$0xf]
    %v2578 = vld [vmem:[%s5 + $0x34] sm:$0xf]
    %v2579 = vld [vmem:[%s5 + $0x38] sm:$0xf]
    %v2580 = vld [vmem:[%s5 + $0x3c] sm:$0xf]
    %v2581 = vld [vmem:[%s5 + $0x40] sm:$0xf]
    %v2582 = vld [vmem:[%s5 + $0x44] sm:$0xf]
    %v2583 = vld [vmem:[%s5 + $0x48] sm:$0xf]
    %v2584 = vld [vmem:[%s5 + $0x4c] sm:$0xf]
    %v2585 = vld [vmem:[%s5 + $0x50] sm:$0xf]
    %v2586 = vld [vmem:[%s5 + $0x54] sm:$0xf]
    %v2587 = vld [vmem:[%s5 + $0x58] sm:$0xf]
    %v2588 = vld [vmem:[%s5 + $0x5c] sm:$0xf]
    %v2589 = vld [vmem:[%s5 + $0x60] sm:$0xf]
    %v2590 = vld [vmem:[%s5 + $0x64] sm:$0xf]
    %v2591 = vld [vmem:[%s5 + $0x68] sm:$0xf]
    %v2592 = vld [vmem:[%s5 + $0x6c] sm:$0xf]
    %v2593 = vld [vmem:[%s5 + $0x70] sm:$0xf]
    %v2594 = vld [vmem:[%s5 + $0x74] sm:$0xf]
    %v2595 = vld [vmem:[%s5 + $0x78] sm:$0xf]
    %v2596 = vld [vmem:[%s5 + $0x7c] sm:$0xf]
    %v2597 = vld [vmem:[%s6] sm:$0x1]
    %v2599 = vperm.slane %v2597, 0
    %v2633 = vunpack.c.l.b16 %v2565
    %v2634 = vunpack.c.l.b16 %v2566
    %v2635 = vunpack.c.l.b16 %v2567
    %v2636 = vunpack.c.l.b16 %v2568
    %v2637 = vunpack.c.l.b16 %v2569
    %v2638 = vunpack.c.l.b16 %v2570
    %v2639 = vunpack.c.l.b16 %v2571
    %v2640 = vunpack.c.l.b16 %v2572
    %v2641 = vunpack.c.l.b16 %v2573
    %v2642 = vunpack.c.l.b16 %v2574
    %v2643 = vunpack.c.l.b16 %v2575
    %v2644 = vunpack.c.l.b16 %v2576
    %v2645 = vunpack.c.l.b16 %v2577
    %v2646 = vunpack.c.l.b16 %v2578
    %v2647 = vunpack.c.l.b16 %v2579
    %v2648 = vunpack.c.l.b16 %v2580
    %v2649 = vunpack.c.l.b16 %v2581
    %v2650 = vunpack.c.l.b16 %v2582
    %v2651 = vunpack.c.l.b16 %v2583
    %v2652 = vunpack.c.l.b16 %v2584
    %v2653 = vunpack.c.l.b16 %v2585
    %v2654 = vunpack.c.l.b16 %v2586
    %v2655 = vunpack.c.l.b16 %v2587
    %v2656 = vunpack.c.l.b16 %v2588
    %v2657 = vunpack.c.l.b16 %v2589
    %v2658 = vunpack.c.l.b16 %v2590
    %v2659 = vunpack.c.l.b16 %v2591
    %v2660 = vunpack.c.l.b16 %v2592
    %v2661 = vunpack.c.l.b16 %v2593
    %v2662 = vunpack.c.l.b16 %v2594
    %v2663 = vunpack.c.l.b16 %v2595
    %v2664 = vunpack.c.l.b16 %v2596
    %v2665 = vpack.c.b16 %v2634, %v2633
    %v2666 = vpack.c.b16 %v2636, %v2635
    %v2667 = vpack.c.b16 %v2638, %v2637
    %v2668 = vpack.c.b16 %v2640, %v2639
    %v2669 = vpack.c.b16 %v2642, %v2641
    %v2670 = vpack.c.b16 %v2644, %v2643
    %v2671 = vpack.c.b16 %v2646, %v2645
    %v2672 = vpack.c.b16 %v2648, %v2647
    %v2673 = vpack.c.b16 %v2650, %v2649
    %v2674 = vpack.c.b16 %v2652, %v2651
    %v2675 = vpack.c.b16 %v2654, %v2653
    %v2676 = vpack.c.b16 %v2656, %v2655
    %v2677 = vpack.c.b16 %v2658, %v2657
    %v2678 = vpack.c.b16 %v2660, %v2659
    %v2679 = vpack.c.b16 %v2662, %v2661
    %v2680 = vpack.c.b16 %v2664, %v2663
    %2697 = vmatpush.bf16.msra.mxu0 %v2672
    %2698 = vmatpush.bf16.msra.mxu0 %v2671
    %2699 = vmatpush.bf16.msra.mxu0 %v2670
    %2700 = vmatpush.bf16.msra.mxu0 %v2669
    %2701 = vmatpush.bf16.msra.mxu0 %v2668
    %2702 = vmatpush.bf16.msra.mxu0 %v2667
    %2703 = vmatpush.bf16.msra.mxu0 %v2666
    %2704 = vmatpush.bf16.msra.mxu0 %v2665
    %2705 = vmatmul.bf16.gmra.mxu0 %v2563
    %v2706 = vpop.f32.mrf.mxu0
    %v2707 = vadd.f32 %v2599, %v2706
    %v2708 = vpop.f32.mrf.mxu0
    %2709 = vdwg.mxu0
    %2710 = vmatpush.bf16.msra.mxu0 %v2680
    %2711 = vmatpush.bf16.msra.mxu0 %v2679
    %2712 = vmatpush.bf16.msra.mxu0 %v2678
    %2713 = vmatpush.bf16.msra.mxu0 %v2677
    %2714 = vmatpush.bf16.msra.mxu0 %v2676
    %2715 = vmatpush.bf16.msra.mxu0 %v2675
    %2716 = vmatpush.bf16.msra.mxu0 %v2674
    %2717 = vmatpush.bf16.msra.mxu0 %v2673
    %2718 = vmatmul.bf16.gmra.mxu0 %v2564
    %v2719 = vpop.f32.mrf.mxu0
    %v2720 = vadd.f32 %v2707, %v2719
    %v2721 = vpop.f32.mrf.mxu0
    %2722 = vdwg.mxu0
    %v2723 = vmax.f32 %v2720, 0.0
    %v2724 = vpack.c.bf16 %v2723, %v2723
    %v2725 = vld [vmem:[%s7] sm:$0xf]
    %v2726 = vld [vmem:[%s7 + $0x4] sm:$0xf]
    %v2727 = vld [vmem:[%s7 + $0x8] sm:$0xf]
    %v2728 = vld [vmem:[%s7 + $0xc] sm:$0xf]
    %v2729 = vld [vmem:[%s8] sm:$0x1]
    %v2731 = vperm.slane %v2729, 0
    %v2737 = vunpack.c.l.b16 %v2725
    %v2738 = vunpack.c.l.b16 %v2726
    %v2739 = vunpack.c.l.b16 %v2727
    %v2740 = vunpack.c.l.b16 %v2728
    %v2741 = vpack.c.b16 %v2738, %v2737
    %v2742 = vpack.c.b16 %v2740, %v2739
    %vm2745 = vcmask 261120
    %v2747 = vsel %vm2745, %v2724, 0
    %2749 = vmatpush.bf16.msra.mxu0 0
    %2750 = vmatpush.bf16.msra.mxu0 0
    %2751 = vmatpush.bf16.msra.mxu0 0
    %2752 = vmatpush.bf16.msra.mxu0 0
    %2753 = vmatpush.bf16.msra.mxu0 0
    %2754 = vmatpush.bf16.msra.mxu0 0
    %2755 = vmatpush.bf16.msra.mxu0 %v2742
    %2756 = vmatpush.bf16.msra.mxu0 %v2741
    %2757 = vmatmul.bf16.gmra.mxu0 %v2747
    %v2758 = vpop.f32.mrf.mxu0
    %v2759 = vadd.f32 %v2731, %v2758
    %v2760 = vpop.f32.mrf.mxu0
    %2761 = vdwg.mxu0
    %v2762 = vlaneseq
    %v2763 = vand.u32 %v2762, 127
    %vm2764 = vcmp.eq.s32.totalorder %v2763, 0
    %vm2765 = vcmp.eq.s32.totalorder %v2763, 1
    %v2766 = vsel %vm2765, 1.0, 0.5
    %v2767 = vsel %vm2764, 1.0, %v2766
    %vm2768 = vcmp.eq.s32.totalorder %v2763, 2
    %v2769 = vsel %vm2768, 0.5, 0.0
    %v2770 = vtanh.pop %v2759
    %v2771 = vmul.f32 %v2770, %v2767
    %v2772 = vadd.f32 %v2771, %v2769
    %vm2773 = vcmask 17408
    %2774 = vst.msk [vmem:[#allocation7] sm:$0x3] %vm2773, %v2772
    // Predicated region
    $region46: #{_fused_forward.1} parent=1 // pred_check
      _
    $region47: #{_fused_forward.1} parent=1 // pred_check_branch
      %2776 = sbr.rel (0) target = $region49
    $region48: #{_fused_forward.1} parent=1 // pred_region
      %2778 = vsyncadd [#allocation4], 0
      %s2780 = sshll.u32 [#allocation7], 4
      %s2781 = int_to_ptr.vmem [resolvable:$true] %s2780
      %s2782 = sshll.u32 %s9, 4
      %s2783 = int_to_ptr.hbm [resolvable:$true] %s2782
      %2785 = dma.vmem_to_hbm [thread:$0]  %s2781, 32, %s2783, [#allocation4]
    $region49: #{_fused_forward.1} parent=1 // pred_fallthru
      _
    // Predicated region
    $region50: #{_fused_forward.1} parent=1 // pred_check
      _
    $region51: #{_fused_forward.1} parent=1 // pred_check_branch
      %2787 = sbr.rel (0) target = $region53
    $region52: #{_fused_forward.1} parent=1 // pred_region
      %2789 = dma.done [#allocation4], 32
    $region53: #{_fused_forward.1} parent=1 // pred_fallthru
      _
    %2790 = vsyncpa [#allocation3], 1
    %2791 = vsyncpa [#allocation6], 1
    %2792 = vsyncpa [#allocation4], 1

</llo_original>
